<compile_context>
chip_gen: v7x
topology: tpu7x:2x2x1
jax: 0.10.0
libtpu: 0.0.40
codegen_flags: <defaults>
</compile_context>

<pallas_src>
import functools

import jax
import jax.numpy as jnp
from jax import lax
from jax.experimental import pallas as pl
from jax.experimental.pallas import tpu as pltpu

BN_EPS = 1e-5
# Left/right halo (in flattened-spatial elements) of the depthwise slab.  Must be
# >= W + 1 (so vertical out-of-range taps land in the zero border) and a multiple
# of 128 so the interior store is lane-aligned.
PAD = 128


# ----------------------------------------------------------------------------
# Fused ConvBlock kernel: one grid step == one image.  All activations live in
# channel-major (C, H*W) layout (channels on sublanes, flattened spatial on lanes).
# ----------------------------------------------------------------------------
def conv_block_kernel(x_ref, dw1_ref, db1_ref, pw1_ref, s1_ref, sh1_ref,
                      dw2_ref, db2_ref, pw2_ref, s2_ref, sh2_ref,
                      sw1t_ref, sb1_ref, sw2_ref, sb2_ref, rw_ref, rb_ref,
                      o_ref, slab_ref, *, W):
    cout = o_ref.shape[1]
    hw = x_ref.shape[2]
    cmax = slab_ref.shape[0]

    # Border-only zeroing of the slab (the interior is fully overwritten by each
    # depthwise stage).  Done every grid step -> safe with per-core scratch on v7x.
    zeros_pad = jnp.zeros((cmax, PAD), jnp.float32)
    slab_ref[:, :PAD] = zeros_pad
    slab_ref[:, PAD + hw:] = zeros_pad

    # Masks for the within-row (horizontal) borders of the flattened image.  The
    # vertical borders are handled for free by the slab's zero halo.
    w_idx = lax.broadcasted_iota(jnp.int32, (1, hw), 1) % W
    not_left = w_idx != 0            # valid positions for a dx = -1 tap
    not_right = w_idx != (W - 1)     # valid positions for a dx = +1 tap

    def depthwise3x3(img, dw_ref, db_ref):
        # img: (C, H*W) f32.  3x3 depthwise conv (padding=1) as 9 VPU taps reading
        # lane-shifted slices of the slab REF (no materialized slab value).
        c = img.shape[0]
        slab_ref[:c, PAD:PAD + hw] = img
        acc = jnp.zeros_like(img)
        for ky in range(3):
            for kx in range(3):
                shift = (ky - 1) * W + (kx - 1)
                tap = slab_ref[:c, PAD + shift:PAD + shift + hw]   # (C, H*W)
                if kx == 0:
                    tap = jnp.where(not_left, tap, 0.0)
                elif kx == 2:
                    tap = jnp.where(not_right, tap, 0.0)
                t = 3 * ky + kx
                acc = acc + tap * dw_ref[:, t:t + 1]               # per-channel weight
        return acc + db_ref[...]                                   # depthwise bias

    def pointwise_bn_relu(acc, pw_ref, s_ref, sh_ref):
        # 1x1 conv as (Cout, C) @ (C, H*W): lane-dense N = H*W on the MXU,
        # then folded BatchNorm + ReLU.
        z = jnp.dot(pw_ref[...], acc, preferred_element_type=jnp.float32)
        return jnp.maximum(z * s_ref[...] + sh_ref[...], 0.0)      # (Cout, H*W)

    x = x_ref[0]                                                   # (Cin, H*W)
    h1 = pointwise_bn_relu(depthwise3x3(x, dw1_ref, db1_ref),
                           pw1_ref, s1_ref, sh1_ref)
    h2 = pointwise_bn_relu(depthwise3x3(h1, dw2_ref, db2_ref),
                           pw2_ref, s2_ref, sh2_ref)

    # SE block: global average pool -> 1x1 -> ReLU -> 1x1 -> sigmoid -> scale.
    # Done with broadcasts + reductions (channel counts are tiny).
    pooled = jnp.mean(h2, axis=1, keepdims=True)                   # (Cout, 1)
    hid = jnp.sum(sw1t_ref[...] * pooled, axis=0, keepdims=True) + sb1_ref[...]
    hid = jnp.maximum(hid, 0.0)                                    # (1, Cr)
    gate = jax.nn.sigmoid(
        jnp.sum(sw2_ref[...] * hid, axis=1, keepdims=True) + sb2_ref[...])  # (Cout, 1)

    # Residual 1x1 conv on the original input, then add.  Lane-dense store.
    ident = jnp.dot(rw_ref[...], x, preferred_element_type=jnp.float32) + rb_ref[...]
    o_ref[0] = h2 * gate + ident                                   # (Cout, H*W)


# ----------------------------------------------------------------------------
# Parameter setup (PyTorch-layout weights) / BN folding / wrapper
# ----------------------------------------------------------------------------
def make_params(key, cin, cout, reduction=8):
    ks = jax.random.split(key, 26)
    g = lambda k, s, sc=0.2: jax.random.normal(k, s, jnp.float32) * sc
    cr = max(cout // reduction, 1)
    p = {}
    for i, (c_in, c_out) in ((1, (cin, cout)), (2, (cout, cout))):
        off = (i - 1) * 10
        p[f"dw_w{i}"] = g(ks[off + 0], (c_in, 3, 3))      # Conv2d(c,c,3,groups=c) weight
        p[f"dw_b{i}"] = g(ks[off + 1], (c_in,))
        p[f"pw_w{i}"] = g(ks[off + 2], (c_out, c_in))     # Conv2d(cin,cout,1) weight
        p[f"pw_b{i}"] = g(ks[off + 3], (c_out,))
        p[f"bn_g{i}"] = 1.0 + g(ks[off + 4], (c_out,), 0.05)
        p[f"bn_b{i}"] = g(ks[off + 5], (c_out,))
        p[f"bn_m{i}"] = g(ks[off + 6], (c_out,))
        p[f"bn_v{i}"] = 1.0 + jnp.abs(g(ks[off + 7], (c_out,), 0.1))
    p["se_w1"] = g(ks[20], (cr, cout))                    # Conv2d(cout, cout//r, 1)
    p["se_b1"] = g(ks[21], (cr,))
    p["se_w2"] = g(ks[22], (cout, cr))                    # Conv2d(cout//r, cout, 1)
    p["se_b2"] = g(ks[23], (cout,))
    if cin != cout:
        p["res_w"] = g(ks[24], (cout, cin))               # Conv2d(cin, cout, 1)
        p["res_b"] = g(ks[25], (cout,))
    return p


def fold_bn(gamma, beta, mean, var, pw_bias):
    scale = gamma / jnp.sqrt(var + BN_EPS)
    shift = beta + (pw_bias - mean) * scale
    return scale, shift


def conv_block_forward(x_nchw, p):
    """Fused ConvBlock forward in PyTorch NCHW layout using one Pallas kernel."""
    N, Cin, H, W = x_nchw.shape
    HW = H * W
    Cout = p["pw_w1"].shape[0]
    Cr = p["se_w1"].shape[0]
    CMAX = max(Cin, Cout)
    assert W + 1 <= PAD, "slab halo too small for this width"

    s1, sh1 = fold_bn(p["bn_g1"], p["bn_b1"], p["bn_m1"], p["bn_v1"], p["pw_b1"])
    s2, sh2 = fold_bn(p["bn_g2"], p["bn_b2"], p["bn_m2"], p["bn_v2"], p["pw_b2"])

    col = lambda v: v.reshape(-1, 1)
    row = lambda v: v.reshape(1, -1)

    if "res_w" in p:                       # in_channels != out_channels
        res_w, res_b = p["res_w"], p["res_b"]
    else:                                  # nn.Identity() residual
        res_w = jnp.eye(Cin, dtype=jnp.float32)
        res_b = jnp.zeros((Cout,), jnp.float32)

    # No channel padding anywhere: exact HBM bytes in and out.
    args = (
        x_nchw.reshape(N, Cin, HW),
        p["dw_w1"].reshape(Cin, 9), col(p["dw_b1"]),
        p["pw_w1"], col(s1), col(sh1),
        p["dw_w2"].reshape(Cout, 9), col(p["dw_b2"]),
        p["pw_w2"], col(s2), col(sh2),
        p["se_w1"].T, row(p["se_b1"]),     # (Cout, Cr), (1, Cr)
        p["se_w2"], col(p["se_b2"]),       # (Cout, Cr), (Cout, 1)
        res_w, col(res_b),
    )

    def full(shape):
        return pl.BlockSpec(shape, lambda n: (0,) * len(shape))

    in_specs = [
        pl.BlockSpec((1, Cin, HW), lambda n: (n, 0, 0)),
        full((Cin, 9)), full((Cin, 1)),
        full((Cout, Cin)), full((Cout, 1)), full((Cout, 1)),
        full((Cout, 9)), full((Cout, 1)),
        full((Cout, Cout)), full((Cout, 1)), full((Cout, 1)),
        full((Cout, Cr)), full((1, Cr)),
        full((Cout, Cr)), full((Cout, 1)),
        full((Cout, Cin)), full((Cout, 1)),
    ]

    out = pl.pallas_call(
        functools.partial(conv_block_kernel, W=W),
        out_shape=jax.ShapeDtypeStruct((N, Cout, HW), jnp.float32),
        grid=(N,),
        in_specs=in_specs,
        out_specs=pl.BlockSpec((1, Cout, HW), lambda n: (n, 0, 0)),
        scratch_shapes=[pltpu.VMEM((CMAX, 2 * PAD + HW), jnp.float32)],
        compiler_params=pltpu.CompilerParams(
            dimension_semantics=("parallel",)),   # v7x: batch sharded over 2 TCs
    )(*args)
    return out.reshape(N, Cout, H, W)             # free reshape -> NCHW


# ----------------------------------------------------------------------------
# Pure-JAX reference (NCHW, mirrors the PyTorch module) for correctness check
# ----------------------------------------------------------------------------
def _ref_dwsep(x, dw_w, dw_b, pw_w, pw_b, g, b, m, v):
    cin = x.shape[1]
    cout = pw_w.shape[0]
    dn = ("NCHW", "OIHW", "NCHW")
    y = lax.conv_general_dilated(x, dw_w.reshape(cin, 1, 3, 3), (1, 1), "SAME",
                                 dimension_numbers=dn, feature_group_count=cin)
    y = y + dw_b.reshape(1, cin, 1, 1)
    y = lax.conv_general_dilated(y, pw_w.reshape(cout, cin, 1, 1), (1, 1), "SAME",
                                 dimension_numbers=dn)
    y = y + pw_b.reshape(1, cout, 1, 1)
    inv = (g / jnp.sqrt(v + BN_EPS)).reshape(1, -1, 1, 1)
    y = (y - m.reshape(1, -1, 1, 1)) * inv + b.reshape(1, -1, 1, 1)
    return jnp.maximum(y, 0.0)


def ref_forward(x, p):
    out = _ref_dwsep(x, p["dw_w1"], p["dw_b1"], p["pw_w1"], p["pw_b1"],
                     p["bn_g1"], p["bn_b1"], p["bn_m1"], p["bn_v1"])
    out = _ref_dwsep(out, p["dw_w2"], p["dw_b2"], p["pw_w2"], p["pw_b2"],
                     p["bn_g2"], p["bn_b2"], p["bn_m2"], p["bn_v2"])
    pooled = jnp.mean(out, axis=(2, 3))                              # (N, Cout)
    h = jnp.maximum(pooled @ p["se_w1"].T + p["se_b1"], 0.0)         # (N, Cr)
    s = jax.nn.sigmoid(h @ p["se_w2"].T + p["se_b2"])                # (N, Cout)
    out = out * s[:, :, None, None]
    if "res_w" in p:
        ident = jnp.einsum("nchw,dc->ndhw", x, p["res_w"]) \
            + p["res_b"].reshape(1, -1, 1, 1)
    else:
        ident = x
    return out + ident


# ----------------------------------------------------------------------------
if __name__ == "__main__":
    N, CIN, COUT, H, W = 2, 4, 8, 16, 16

    key = jax.random.PRNGKey(0)
    kx, kp = jax.random.split(key)
    x_nchw = jax.random.normal(kx, (N, CIN, H, W), jnp.float32)   # PyTorch layout

    params = make_params(kp, CIN, COUT, reduction=8)

    y = jax.jit(conv_block_forward)(x_nchw, params)
    y = jax.block_until_ready(y)

    y_ref = ref_forward(x_nchw, params)
    assert y.shape == (N, COUT, H, W)
    err = jnp.max(jnp.abs(y - y_ref))
    assert jnp.allclose(y, y_ref, atol=2e-3, rtol=2e-3), f"max err {err}"

    print("KERNEL_OK")
</pallas_src>

<mosaic_0001>
module attributes {stable_mosaic.version = 11 : i64} {
  func.func @conv_block_kernel(%arg0: i32, %arg1: memref<1x4x256xf32, #tpu.memory_space<vmem>>, %arg2: memref<4x9xf32, #tpu.memory_space<vmem>>, %arg3: memref<4x1xf32, #tpu.memory_space<vmem>>, %arg4: memref<8x4xf32, #tpu.memory_space<vmem>>, %arg5: memref<8x1xf32, #tpu.memory_space<vmem>>, %arg6: memref<8x1xf32, #tpu.memory_space<vmem>>, %arg7: memref<8x9xf32, #tpu.memory_space<vmem>>, %arg8: memref<8x1xf32, #tpu.memory_space<vmem>>, %arg9: memref<8x8xf32, #tpu.memory_space<vmem>>, %arg10: memref<8x1xf32, #tpu.memory_space<vmem>>, %arg11: memref<8x1xf32, #tpu.memory_space<vmem>>, %arg12: memref<8x1xf32, #tpu.memory_space<vmem>>, %arg13: memref<1x1xf32, #tpu.memory_space<vmem>>, %arg14: memref<8x1xf32, #tpu.memory_space<vmem>>, %arg15: memref<8x1xf32, #tpu.memory_space<vmem>>, %arg16: memref<8x4xf32, #tpu.memory_space<vmem>>, %arg17: memref<8x1xf32, #tpu.memory_space<vmem>>, %arg18: memref<1x8x256xf32, #tpu.memory_space<vmem>>, %arg19: memref<8x512xf32, #tpu.memory_space<vmem>>) attributes {dimension_semantics = [#tpu.dimension_semantics<parallel>], iteration_bounds = array<i64: 2>, scalar_prefetch = 0 : i64, scratch_operands = 1 : i64, tpu.core_type = #tpu.core_type<tc>, window_params = [{transform_indices = @transform_0, window_bounds = array<i64: 1, 4, 256>}, {pipeline_mode = #tpu.pipeline_mode<synchronous>, transform_indices = @transform_1, window_bounds = array<i64: 4, 9>}, {pipeline_mode = #tpu.pipeline_mode<synchronous>, transform_indices = @transform_2, window_bounds = array<i64: 4, 1>}, {pipeline_mode = #tpu.pipeline_mode<synchronous>, transform_indices = @transform_3, window_bounds = array<i64: 8, 4>}, {pipeline_mode = #tpu.pipeline_mode<synchronous>, transform_indices = @transform_4, window_bounds = array<i64: 8, 1>}, {pipeline_mode = #tpu.pipeline_mode<synchronous>, transform_indices = @transform_5, window_bounds = array<i64: 8, 1>}, {pipeline_mode = #tpu.pipeline_mode<synchronous>, transform_indices = @transform_6, window_bounds = array<i64: 8, 9>}, {pipeline_mode = #tpu.pipeline_mode<synchronous>, transform_indices = @transform_7, window_bounds = array<i64: 8, 1>}, {pipeline_mode = #tpu.pipeline_mode<synchronous>, transform_indices = @transform_8, window_bounds = array<i64: 8, 8>}, {pipeline_mode = #tpu.pipeline_mode<synchronous>, transform_indices = @transform_9, window_bounds = array<i64: 8, 1>}, {pipeline_mode = #tpu.pipeline_mode<synchronous>, transform_indices = @transform_10, window_bounds = array<i64: 8, 1>}, {pipeline_mode = #tpu.pipeline_mode<synchronous>, transform_indices = @transform_11, window_bounds = array<i64: 8, 1>}, {pipeline_mode = #tpu.pipeline_mode<synchronous>, transform_indices = @transform_12, window_bounds = array<i64: 1, 1>}, {pipeline_mode = #tpu.pipeline_mode<synchronous>, transform_indices = @transform_13, window_bounds = array<i64: 8, 1>}, {pipeline_mode = #tpu.pipeline_mode<synchronous>, transform_indices = @transform_14, window_bounds = array<i64: 8, 1>}, {pipeline_mode = #tpu.pipeline_mode<synchronous>, transform_indices = @transform_15, window_bounds = array<i64: 8, 4>}, {pipeline_mode = #tpu.pipeline_mode<synchronous>, transform_indices = @transform_16, window_bounds = array<i64: 8, 1>}, {transform_indices = @transform_17, window_bounds = array<i64: 1, 8, 256>}]} {
    %cst = arith.constant 0.000000e+00 : f32
    %0 = vector.broadcast %cst : f32 to vector<8x128xf32>
    %c0 = arith.constant 0 : index
    %c0_0 = arith.constant 0 : index
    %1 = vector.load %arg19[%c0, %c0_0] : memref<8x512xf32, #tpu.memory_space<vmem>>, vector<8x128xf32>
    tpu.vector_store %arg19[%c0, %c0_0], %0 {strides = array<i32>} : memref<8x512xf32, #tpu.memory_space<vmem>>, vector<8x128xf32>,
    %c0_1 = arith.constant 0 : index
    %c384 = arith.constant 384 : index
    %2 = vector.load %arg19[%c0_1, %c384] : memref<8x512xf32, #tpu.memory_space<vmem>>, vector<8x128xf32>
    tpu.vector_store %arg19[%c0_1, %c384], %0 {strides = array<i32>} : memref<8x512xf32, #tpu.memory_space<vmem>>, vector<8x128xf32>,
    %3 = tpu.iota {dimensions = array<i32: 1>} : vector<1x256xi32>
    %c16_i32 = arith.constant 16 : i32
    %c0_i32 = arith.constant 0 : i32
    %4 = arith.cmpi eq, %c16_i32, %c0_i32 : i32
    %c1_i32 = arith.constant 1 : i32
    %5 = arith.select %4, %c1_i32, %c16_i32 : i32
    %6 = vector.broadcast %5 : i32 to vector<1x256xi32>
    %7 = arith.remsi %3, %6 : vector<1x256xi32>
    %c0_i32_2 = arith.constant 0 : i32
    %8 = vector.broadcast %c0_i32_2 : i32 to vector<1x256xi32>
    %9 = arith.cmpi ne, %7, %8 : vector<1x256xi32>
    %c0_i32_3 = arith.constant 0 : i32
    %10 = vector.broadcast %c0_i32_3 : i32 to vector<1x256xi32>
    %11 = arith.cmpi slt, %7, %10 : vector<1x256xi32>
    %c0_i32_4 = arith.constant 0 : i32
    %12 = arith.cmpi slt, %5, %c0_i32_4 : i32
    %13 = vector.broadcast %12 : i1 to vector<1x256xi1>
    %14 = vector.broadcast %13 : vector<1x256xi1> to vector<1x256xi1>
    %15 = arith.xori %11, %14 : vector<1x256xi1>
    %16 = arith.andi %15, %9 : vector<1x256xi1>
    %17 = vector.broadcast %5 : i32 to vector<1x256xi32>
    %18 = arith.addi %7, %17 : vector<1x256xi32>
    %19 = arith.select %16, %18, %7 : vector<1x256xi1>, vector<1x256xi32>
    %c0_i32_5 = arith.constant 0 : i32
    %20 = vector.broadcast %c0_i32_5 : i32 to vector<1x256xi32>
    %21 = arith.cmpi ne, %19, %20 : vector<1x256xi32>
    %c15_i32 = arith.constant 15 : i32
    %22 = vector.broadcast %c15_i32 : i32 to vector<1x256xi32>
    %23 = arith.cmpi ne, %19, %22 : vector<1x256xi32>
    %c0_6 = arith.constant 0 : index
    %c0_7 = arith.constant 0 : index
    %c0_8 = arith.constant 0 : index
    %24 = vector.load %arg1[%c0_6, %c0_7, %c0_8] : memref<1x4x256xf32, #tpu.memory_space<vmem>>, vector<1x4x256xf32>
    %25 = vector.shape_cast %24 : vector<1x4x256xf32> to vector<4x256xf32>
    %c0_9 = arith.constant 0 : index
    %c128 = arith.constant 128 : index
    %26 = vector.load %arg19[%c0_9, %c128] : memref<8x512xf32, #tpu.memory_space<vmem>>, vector<4x256xf32>
    tpu.vector_store %arg19[%c0_9, %c128], %25 {strides = array<i32>} : memref<8x512xf32, #tpu.memory_space<vmem>>, vector<4x256xf32>,
    %cst_10 = arith.constant 0.000000e+00 : f32
    %27 = vector.broadcast %cst_10 : f32 to vector<4x256xf32>
    %c0_11 = arith.constant 0 : index
    %c111 = arith.constant 111 : index
    %28 = vector.load %arg19[%c0_11, %c111] : memref<8x512xf32, #tpu.memory_space<vmem>>, vector<4x256xf32>
    %cst_12 = arith.constant 0.000000e+00 : f32
    %29 = vector.shape_cast %21 : vector<1x256xi1> to vector<1x256xi1>
    %30 = vector.broadcast %29 : vector<1x256xi1> to vector<4x256xi1>
    %31 = vector.broadcast %cst_12 : f32 to vector<4x256xf32>
    %32 = arith.select %30, %28, %31 : vector<4x256xi1>, vector<4x256xf32>
    %c0_13 = arith.constant 0 : index
    %c0_14 = arith.constant 0 : index
    %33 = vector.load %arg2[%c0_13, %c0_14] : memref<4x9xf32, #tpu.memory_space<vmem>>, vector<4x1xf32>
    %34 = vector.broadcast %33 : vector<4x1xf32> to vector<4x256xf32>
    %35 = arith.mulf %32, %34 : vector<4x256xf32>
    %36 = arith.addf %27, %35 : vector<4x256xf32>
    %c0_15 = arith.constant 0 : index
    %c112 = arith.constant 112 : index
    %37 = vector.load %arg19[%c0_15, %c112] : memref<8x512xf32, #tpu.memory_space<vmem>>, vector<4x256xf32>
    %c0_16 = arith.constant 0 : index
    %c1 = arith.constant 1 : index
    %38 = vector.load %arg2[%c0_16, %c1] : memref<4x9xf32, #tpu.memory_space<vmem>>, vector<4x1xf32>
    %39 = vector.broadcast %38 : vector<4x1xf32> to vector<4x256xf32>
    %40 = arith.mulf %37, %39 : vector<4x256xf32>
    %41 = arith.addf %36, %40 : vector<4x256xf32>
    %c0_17 = arith.constant 0 : index
    %c113 = arith.constant 113 : index
    %42 = vector.load %arg19[%c0_17, %c113] : memref<8x512xf32, #tpu.memory_space<vmem>>, vector<4x256xf32>
    %cst_18 = arith.constant 0.000000e+00 : f32
    %43 = vector.shape_cast %23 : vector<1x256xi1> to vector<1x256xi1>
    %44 = vector.broadcast %43 : vector<1x256xi1> to vector<4x256xi1>
    %45 = vector.broadcast %cst_18 : f32 to vector<4x256xf32>
    %46 = arith.select %44, %42, %45 : vector<4x256xi1>, vector<4x256xf32>
    %c0_19 = arith.constant 0 : index
    %c2 = arith.constant 2 : index
    %47 = vector.load %arg2[%c0_19, %c2] : memref<4x9xf32, #tpu.memory_space<vmem>>, vector<4x1xf32>
    %48 = vector.broadcast %47 : vector<4x1xf32> to vector<4x256xf32>
    %49 = arith.mulf %46, %48 : vector<4x256xf32>
    %50 = arith.addf %41, %49 : vector<4x256xf32>
    %c0_20 = arith.constant 0 : index
    %c127 = arith.constant 127 : index
    %51 = vector.load %arg19[%c0_20, %c127] : memref<8x512xf32, #tpu.memory_space<vmem>>, vector<4x256xf32>
    %cst_21 = arith.constant 0.000000e+00 : f32
    %52 = vector.shape_cast %21 : vector<1x256xi1> to vector<1x256xi1>
    %53 = vector.broadcast %52 : vector<1x256xi1> to vector<4x256xi1>
    %54 = vector.broadcast %cst_21 : f32 to vector<4x256xf32>
    %55 = arith.select %53, %51, %54 : vector<4x256xi1>, vector<4x256xf32>
    %c0_22 = arith.constant 0 : index
    %c3 = arith.constant 3 : index
    %56 = vector.load %arg2[%c0_22, %c3] : memref<4x9xf32, #tpu.memory_space<vmem>>, vector<4x1xf32>
    %57 = vector.broadcast %56 : vector<4x1xf32> to vector<4x256xf32>
    %58 = arith.mulf %55, %57 : vector<4x256xf32>
    %59 = arith.addf %50, %58 : vector<4x256xf32>
    %c0_23 = arith.constant 0 : index
    %c128_24 = arith.constant 128 : index
    %60 = vector.load %arg19[%c0_23, %c128_24] : memref<8x512xf32, #tpu.memory_space<vmem>>, vector<4x256xf32>
    %c0_25 = arith.constant 0 : index
    %c4 = arith.constant 4 : index
    %61 = vector.load %arg2[%c0_25, %c4] : memref<4x9xf32, #tpu.memory_space<vmem>>, vector<4x1xf32>
    %62 = vector.broadcast %61 : vector<4x1xf32> to vector<4x256xf32>
    %63 = arith.mulf %60, %62 : vector<4x256xf32>
    %64 = arith.addf %59, %63 : vector<4x256xf32>
    %c0_26 = arith.constant 0 : index
    %c129 = arith.constant 129 : index
    %65 = vector.load %arg19[%c0_26, %c129] : memref<8x512xf32, #tpu.memory_space<vmem>>, vector<4x256xf32>
    %cst_27 = arith.constant 0.000000e+00 : f32
    %66 = vector.shape_cast %23 : vector<1x256xi1> to vector<1x256xi1>
    %67 = vector.broadcast %66 : vector<1x256xi1> to vector<4x256xi1>
    %68 = vector.broadcast %cst_27 : f32 to vector<4x256xf32>
    %69 = arith.select %67, %65, %68 : vector<4x256xi1>, vector<4x256xf32>
    %c0_28 = arith.constant 0 : index
    %c5 = arith.constant 5 : index
    %70 = vector.load %arg2[%c0_28, %c5] : memref<4x9xf32, #tpu.memory_space<vmem>>, vector<4x1xf32>
    %71 = vector.broadcast %70 : vector<4x1xf32> to vector<4x256xf32>
    %72 = arith.mulf %69, %71 : vector<4x256xf32>
    %73 = arith.addf %64, %72 : vector<4x256xf32>
    %c0_29 = arith.constant 0 : index
    %c143 = arith.constant 143 : index
    %74 = vector.load %arg19[%c0_29, %c143] : memref<8x512xf32, #tpu.memory_space<vmem>>, vector<4x256xf32>
    %cst_30 = arith.constant 0.000000e+00 : f32
    %75 = vector.shape_cast %21 : vector<1x256xi1> to vector<1x256xi1>
    %76 = vector.broadcast %75 : vector<1x256xi1> to vector<4x256xi1>
    %77 = vector.broadcast %cst_30 : f32 to vector<4x256xf32>
    %78 = arith.select %76, %74, %77 : vector<4x256xi1>, vector<4x256xf32>
    %c0_31 = arith.constant 0 : index
    %c6 = arith.constant 6 : index
    %79 = vector.load %arg2[%c0_31, %c6] : memref<4x9xf32, #tpu.memory_space<vmem>>, vector<4x1xf32>
    %80 = vector.broadcast %79 : vector<4x1xf32> to vector<4x256xf32>
    %81 = arith.mulf %78, %80 : vector<4x256xf32>
    %82 = arith.addf %73, %81 : vector<4x256xf32>
    %c0_32 = arith.constant 0 : index
    %c144 = arith.constant 144 : index
    %83 = vector.load %arg19[%c0_32, %c144] : memref<8x512xf32, #tpu.memory_space<vmem>>, vector<4x256xf32>
    %c0_33 = arith.constant 0 : index
    %c7 = arith.constant 7 : index
    %84 = vector.load %arg2[%c0_33, %c7] : memref<4x9xf32, #tpu.memory_space<vmem>>, vector<4x1xf32>
    %85 = vector.broadcast %84 : vector<4x1xf32> to vector<4x256xf32>
    %86 = arith.mulf %83, %85 : vector<4x256xf32>
    %87 = arith.addf %82, %86 : vector<4x256xf32>
    %c0_34 = arith.constant 0 : index
    %c145 = arith.constant 145 : index
    %88 = vector.load %arg19[%c0_34, %c145] : memref<8x512xf32, #tpu.memory_space<vmem>>, vector<4x256xf32>
    %cst_35 = arith.constant 0.000000e+00 : f32
    %89 = vector.shape_cast %23 : vector<1x256xi1> to vector<1x256xi1>
    %90 = vector.broadcast %89 : vector<1x256xi1> to vector<4x256xi1>
    %91 = vector.broadcast %cst_35 : f32 to vector<4x256xf32>
    %92 = arith.select %90, %88, %91 : vector<4x256xi1>, vector<4x256xf32>
    %c0_36 = arith.constant 0 : index
    %c8 = arith.constant 8 : index
    %93 = vector.load %arg2[%c0_36, %c8] : memref<4x9xf32, #tpu.memory_space<vmem>>, vector<4x1xf32>
    %94 = vector.broadcast %93 : vector<4x1xf32> to vector<4x256xf32>
    %95 = arith.mulf %92, %94 : vector<4x256xf32>
    %96 = arith.addf %87, %95 : vector<4x256xf32>
    %c0_37 = arith.constant 0 : index
    %c0_38 = arith.constant 0 : index
    %97 = vector.load %arg3[%c0_37, %c0_38] : memref<4x1xf32, #tpu.memory_space<vmem>>, vector<4x1xf32>
    %98 = vector.broadcast %97 : vector<4x1xf32> to vector<4x256xf32>
    %99 = arith.addf %96, %98 : vector<4x256xf32>
    %c0_39 = arith.constant 0 : index
    %c0_40 = arith.constant 0 : index
    %100 = vector.load %arg4[%c0_39, %c0_40] : memref<8x4xf32, #tpu.memory_space<vmem>>, vector<8x4xf32>
    %cst_41 = arith.constant dense<0.000000e+00> : vector<8x256xf32>
    %101 = tpu.matmul %100, %99, %cst_41 {dimension_numbers = #tpu.dot_dimension_numbers<[1], [0], [0], [1], [0, 0, 1, 1], [], []>} : vector<8x4xf32>, vector<4x256xf32>, vector<8x256xf32> -> vector<8x256xf32>
    %c0_42 = arith.constant 0 : index
    %c0_43 = arith.constant 0 : index
    %102 = vector.load %arg5[%c0_42, %c0_43] : memref<8x1xf32, #tpu.memory_space<vmem>>, vector<8x1xf32>
    %103 = vector.broadcast %102 : vector<8x1xf32> to vector<8x256xf32>
    %104 = arith.mulf %101, %103 : vector<8x256xf32>
    %c0_44 = arith.constant 0 : index
    %c0_45 = arith.constant 0 : index
    %105 = vector.load %arg6[%c0_44, %c0_45] : memref<8x1xf32, #tpu.memory_space<vmem>>, vector<8x1xf32>
    %106 = vector.broadcast %105 : vector<8x1xf32> to vector<8x256xf32>
    %107 = arith.addf %104, %106 : vector<8x256xf32>
    %cst_46 = arith.constant 0.000000e+00 : f32
    %108 = vector.broadcast %cst_46 : f32 to vector<8x256xf32>
    %109 = arith.maximumf %107, %108 : vector<8x256xf32>
    %c0_47 = arith.constant 0 : index
    %c128_48 = arith.constant 128 : index
    %110 = vector.load %arg19[%c0_47, %c128_48] : memref<8x512xf32, #tpu.memory_space<vmem>>, vector<8x256xf32>
    tpu.vector_store %arg19[%c0_47, %c128_48], %109 {strides = array<i32>} : memref<8x512xf32, #tpu.memory_space<vmem>>, vector<8x256xf32>,
    %cst_49 = arith.constant 0.000000e+00 : f32
    %111 = vector.broadcast %cst_49 : f32 to vector<8x256xf32>
    %c0_50 = arith.constant 0 : index
    %c111_51 = arith.constant 111 : index
    %112 = vector.load %arg19[%c0_50, %c111_51] : memref<8x512xf32, #tpu.memory_space<vmem>>, vector<8x256xf32>
    %cst_52 = arith.constant 0.000000e+00 : f32
    %113 = vector.shape_cast %21 : vector<1x256xi1> to vector<1x256xi1>
    %114 = vector.broadcast %113 : vector<1x256xi1> to vector<8x256xi1>
    %115 = vector.broadcast %cst_52 : f32 to vector<8x256xf32>
    %116 = arith.select %114, %112, %115 : vector<8x256xi1>, vector<8x256xf32>
    %c0_53 = arith.constant 0 : index
    %c0_54 = arith.constant 0 : index
    %117 = vector.load %arg7[%c0_53, %c0_54] : memref<8x9xf32, #tpu.memory_space<vmem>>, vector<8x1xf32>
    %118 = vector.broadcast %117 : vector<8x1xf32> to vector<8x256xf32>
    %119 = arith.mulf %116, %118 : vector<8x256xf32>
    %120 = arith.addf %111, %119 : vector<8x256xf32>
    %c0_55 = arith.constant 0 : index
    %c112_56 = arith.constant 112 : index
    %121 = vector.load %arg19[%c0_55, %c112_56] : memref<8x512xf32, #tpu.memory_space<vmem>>, vector<8x256xf32>
    %c0_57 = arith.constant 0 : index
    %c1_58 = arith.constant 1 : index
    %122 = vector.load %arg7[%c0_57, %c1_58] : memref<8x9xf32, #tpu.memory_space<vmem>>, vector<8x1xf32>
    %123 = vector.broadcast %122 : vector<8x1xf32> to vector<8x256xf32>
    %124 = arith.mulf %121, %123 : vector<8x256xf32>
    %125 = arith.addf %120, %124 : vector<8x256xf32>
    %c0_59 = arith.constant 0 : index
    %c113_60 = arith.constant 113 : index
    %126 = vector.load %arg19[%c0_59, %c113_60] : memref<8x512xf32, #tpu.memory_space<vmem>>, vector<8x256xf32>
    %cst_61 = arith.constant 0.000000e+00 : f32
    %127 = vector.shape_cast %23 : vector<1x256xi1> to vector<1x256xi1>
    %128 = vector.broadcast %127 : vector<1x256xi1> to vector<8x256xi1>
    %129 = vector.broadcast %cst_61 : f32 to vector<8x256xf32>
    %130 = arith.select %128, %126, %129 : vector<8x256xi1>, vector<8x256xf32>
    %c0_62 = arith.constant 0 : index
    %c2_63 = arith.constant 2 : index
    %131 = vector.load %arg7[%c0_62, %c2_63] : memref<8x9xf32, #tpu.memory_space<vmem>>, vector<8x1xf32>
    %132 = vector.broadcast %131 : vector<8x1xf32> to vector<8x256xf32>
    %133 = arith.mulf %130, %132 : vector<8x256xf32>
    %134 = arith.addf %125, %133 : vector<8x256xf32>
    %c0_64 = arith.constant 0 : index
    %c127_65 = arith.constant 127 : index
    %135 = vector.load %arg19[%c0_64, %c127_65] : memref<8x512xf32, #tpu.memory_space<vmem>>, vector<8x256xf32>
    %cst_66 = arith.constant 0.000000e+00 : f32
    %136 = vector.shape_cast %21 : vector<1x256xi1> to vector<1x256xi1>
    %137 = vector.broadcast %136 : vector<1x256xi1> to vector<8x256xi1>
    %138 = vector.broadcast %cst_66 : f32 to vector<8x256xf32>
    %139 = arith.select %137, %135, %138 : vector<8x256xi1>, vector<8x256xf32>
    %c0_67 = arith.constant 0 : index
    %c3_68 = arith.constant 3 : index
    %140 = vector.load %arg7[%c0_67, %c3_68] : memref<8x9xf32, #tpu.memory_space<vmem>>, vector<8x1xf32>
    %141 = vector.broadcast %140 : vector<8x1xf32> to vector<8x256xf32>
    %142 = arith.mulf %139, %141 : vector<8x256xf32>
    %143 = arith.addf %134, %142 : vector<8x256xf32>
    %c0_69 = arith.constant 0 : index
    %c128_70 = arith.constant 128 : index
    %144 = vector.load %arg19[%c0_69, %c128_70] : memref<8x512xf32, #tpu.memory_space<vmem>>, vector<8x256xf32>
    %c0_71 = arith.constant 0 : index
    %c4_72 = arith.constant 4 : index
    %145 = vector.load %arg7[%c0_71, %c4_72] : memref<8x9xf32, #tpu.memory_space<vmem>>, vector<8x1xf32>
    %146 = vector.broadcast %145 : vector<8x1xf32> to vector<8x256xf32>
    %147 = arith.mulf %144, %146 : vector<8x256xf32>
    %148 = arith.addf %143, %147 : vector<8x256xf32>
    %c0_73 = arith.constant 0 : index
    %c129_74 = arith.constant 129 : index
    %149 = vector.load %arg19[%c0_73, %c129_74] : memref<8x512xf32, #tpu.memory_space<vmem>>, vector<8x256xf32>
    %cst_75 = arith.constant 0.000000e+00 : f32
    %150 = vector.shape_cast %23 : vector<1x256xi1> to vector<1x256xi1>
    %151 = vector.broadcast %150 : vector<1x256xi1> to vector<8x256xi1>
    %152 = vector.broadcast %cst_75 : f32 to vector<8x256xf32>
    %153 = arith.select %151, %149, %152 : vector<8x256xi1>, vector<8x256xf32>
    %c0_76 = arith.constant 0 : index
    %c5_77 = arith.constant 5 : index
    %154 = vector.load %arg7[%c0_76, %c5_77] : memref<8x9xf32, #tpu.memory_space<vmem>>, vector<8x1xf32>
    %155 = vector.broadcast %154 : vector<8x1xf32> to vector<8x256xf32>
    %156 = arith.mulf %153, %155 : vector<8x256xf32>
    %157 = arith.addf %148, %156 : vector<8x256xf32>
    %c0_78 = arith.constant 0 : index
    %c143_79 = arith.constant 143 : index
    %158 = vector.load %arg19[%c0_78, %c143_79] : memref<8x512xf32, #tpu.memory_space<vmem>>, vector<8x256xf32>
    %cst_80 = arith.constant 0.000000e+00 : f32
    %159 = vector.shape_cast %21 : vector<1x256xi1> to vector<1x256xi1>
    %160 = vector.broadcast %159 : vector<1x256xi1> to vector<8x256xi1>
    %161 = vector.broadcast %cst_80 : f32 to vector<8x256xf32>
    %162 = arith.select %160, %158, %161 : vector<8x256xi1>, vector<8x256xf32>
    %c0_81 = arith.constant 0 : index
    %c6_82 = arith.constant 6 : index
    %163 = vector.load %arg7[%c0_81, %c6_82] : memref<8x9xf32, #tpu.memory_space<vmem>>, vector<8x1xf32>
    %164 = vector.broadcast %163 : vector<8x1xf32> to vector<8x256xf32>
    %165 = arith.mulf %162, %164 : vector<8x256xf32>
    %166 = arith.addf %157, %165 : vector<8x256xf32>
    %c0_83 = arith.constant 0 : index
    %c144_84 = arith.constant 144 : index
    %167 = vector.load %arg19[%c0_83, %c144_84] : memref<8x512xf32, #tpu.memory_space<vmem>>, vector<8x256xf32>
    %c0_85 = arith.constant 0 : index
    %c7_86 = arith.constant 7 : index
    %168 = vector.load %arg7[%c0_85, %c7_86] : memref<8x9xf32, #tpu.memory_space<vmem>>, vector<8x1xf32>
    %169 = vector.broadcast %168 : vector<8x1xf32> to vector<8x256xf32>
    %170 = arith.mulf %167, %169 : vector<8x256xf32>
    %171 = arith.addf %166, %170 : vector<8x256xf32>
    %c0_87 = arith.constant 0 : index
    %c145_88 = arith.constant 145 : index
    %172 = vector.load %arg19[%c0_87, %c145_88] : memref<8x512xf32, #tpu.memory_space<vmem>>, vector<8x256xf32>
    %cst_89 = arith.constant 0.000000e+00 : f32
    %173 = vector.shape_cast %23 : vector<1x256xi1> to vector<1x256xi1>
    %174 = vector.broadcast %173 : vector<1x256xi1> to vector<8x256xi1>
    %175 = vector.broadcast %cst_89 : f32 to vector<8x256xf32>
    %176 = arith.select %174, %172, %175 : vector<8x256xi1>, vector<8x256xf32>
    %c0_90 = arith.constant 0 : index
    %c8_91 = arith.constant 8 : index
    %177 = vector.load %arg7[%c0_90, %c8_91] : memref<8x9xf32, #tpu.memory_space<vmem>>, vector<8x1xf32>
    %178 = vector.broadcast %177 : vector<8x1xf32> to vector<8x256xf32>
    %179 = arith.mulf %176, %178 : vector<8x256xf32>
    %180 = arith.addf %171, %179 : vector<8x256xf32>
    %c0_92 = arith.constant 0 : index
    %c0_93 = arith.constant 0 : index
    %181 = vector.load %arg8[%c0_92, %c0_93] : memref<8x1xf32, #tpu.memory_space<vmem>>, vector<8x1xf32>
    %182 = vector.broadcast %181 : vector<8x1xf32> to vector<8x256xf32>
    %183 = arith.addf %180, %182 : vector<8x256xf32>
    %c0_94 = arith.constant 0 : index
    %c0_95 = arith.constant 0 : index
    %184 = vector.load %arg9[%c0_94, %c0_95] : memref<8x8xf32, #tpu.memory_space<vmem>>, vector<8x8xf32>
    %cst_96 = arith.constant dense<0.000000e+00> : vector<8x256xf32>
    %185 = tpu.matmul %184, %183, %cst_96 {dimension_numbers = #tpu.dot_dimension_numbers<[1], [0], [0], [1], [0, 0, 1, 1], [], []>} : vector<8x8xf32>, vector<8x256xf32>, vector<8x256xf32> -> vector<8x256xf32>
    %c0_97 = arith.constant 0 : index
    %c0_98 = arith.constant 0 : index
    %186 = vector.load %arg10[%c0_97, %c0_98] : memref<8x1xf32, #tpu.memory_space<vmem>>, vector<8x1xf32>
    %187 = vector.broadcast %186 : vector<8x1xf32> to vector<8x256xf32>
    %188 = arith.mulf %185, %187 : vector<8x256xf32>
    %c0_99 = arith.constant 0 : index
    %c0_100 = arith.constant 0 : index
    %189 = vector.load %arg11[%c0_99, %c0_100] : memref<8x1xf32, #tpu.memory_space<vmem>>, vector<8x1xf32>
    %190 = vector.broadcast %189 : vector<8x1xf32> to vector<8x256xf32>
    %191 = arith.addf %188, %190 : vector<8x256xf32>
    %cst_101 = arith.constant 0.000000e+00 : f32
    %192 = vector.broadcast %cst_101 : f32 to vector<8x256xf32>
    %193 = arith.maximumf %191, %192 : vector<8x256xf32>
    %cst_102 = arith.constant dense<0.000000e+00> : vector<8xf32>
    %194 = vector.multi_reduction <add>, %193, %cst_102 [1] : vector<8x256xf32> to vector<8xf32>
    %195 = vector.shape_cast %194 : vector<8xf32> to vector<8x1xf32>
    %cst_103 = arith.constant 2.560000e+02 : f32
    %196 = vector.broadcast %cst_103 : f32 to vector<8x1xf32>
    %197 = arith.divf %195, %196 : vector<8x1xf32>
    %c0_104 = arith.constant 0 : index
    %c0_105 = arith.constant 0 : index
    %198 = vector.load %arg12[%c0_104, %c0_105] : memref<8x1xf32, #tpu.memory_space<vmem>>, vector<8x1xf32>
    %199 = arith.mulf %198, %197 : vector<8x1xf32>
    %cst_106 = arith.constant dense<0.000000e+00> : vector<1xf32>
    %200 = vector.multi_reduction <add>, %199, %cst_106 [0] : vector<8x1xf32> to vector<1xf32>
    %201 = vector.shape_cast %200 : vector<1xf32> to vector<1x1xf32>
    %c0_107 = arith.constant 0 : index
    %c0_108 = arith.constant 0 : index
    %202 = vector.load %arg13[%c0_107, %c0_108] : memref<1x1xf32, #tpu.memory_space<vmem>>, vector<1x1xf32>
    %203 = arith.addf %201, %202 : vector<1x1xf32>
    %cst_109 = arith.constant 0.000000e+00 : f32
    %204 = vector.broadcast %cst_109 : f32 to vector<1x1xf32>
    %205 = arith.maximumf %203, %204 : vector<1x1xf32>
    %c0_110 = arith.constant 0 : index
    %c0_111 = arith.constant 0 : index
    %206 = vector.load %arg14[%c0_110, %c0_111] : memref<8x1xf32, #tpu.memory_space<vmem>>, vector<8x1xf32>
    %207 = vector.broadcast %205 : vector<1x1xf32> to vector<8x1xf32>
    %208 = arith.mulf %206, %207 : vector<8x1xf32>
    %cst_112 = arith.constant dense<0.000000e+00> : vector<8xf32>
    %209 = vector.multi_reduction <add>, %208, %cst_112 [1] : vector<8x1xf32> to vector<8xf32>
    %210 = vector.shape_cast %209 : vector<8xf32> to vector<8x1xf32>
    %c0_113 = arith.constant 0 : index
    %c0_114 = arith.constant 0 : index
    %211 = vector.load %arg15[%c0_113, %c0_114] : memref<8x1xf32, #tpu.memory_space<vmem>>, vector<8x1xf32>
    %212 = arith.addf %210, %211 : vector<8x1xf32>
    %213 = arith.negf %212 : vector<8x1xf32>
    %214 = math.exp %213 : vector<8x1xf32>
    %cst_115 = arith.constant 1.000000e+00 : f32
    %215 = vector.broadcast %cst_115 : f32 to vector<8x1xf32>
    %216 = arith.addf %215, %214 : vector<8x1xf32>
    %217 = arith.divf %215, %216 : vector<8x1xf32>
    %c0_116 = arith.constant 0 : index
    %c0_117 = arith.constant 0 : index
    %218 = vector.load %arg16[%c0_116, %c0_117] : memref<8x4xf32, #tpu.memory_space<vmem>>, vector<8x4xf32>
    %cst_118 = arith.constant dense<0.000000e+00> : vector<8x256xf32>
    %219 = tpu.matmul %218, %25, %cst_118 {dimension_numbers = #tpu.dot_dimension_numbers<[1], [0], [0], [1], [0, 0, 1, 1], [], []>} : vector<8x4xf32>, vector<4x256xf32>, vector<8x256xf32> -> vector<8x256xf32>
    %c0_119 = arith.constant 0 : index
    %c0_120 = arith.constant 0 : index
    %220 = vector.load %arg17[%c0_119, %c0_120] : memref<8x1xf32, #tpu.memory_space<vmem>>, vector<8x1xf32>
    %221 = vector.broadcast %220 : vector<8x1xf32> to vector<8x256xf32>
    %222 = arith.addf %219, %221 : vector<8x256xf32>
    %223 = vector.broadcast %217 : vector<8x1xf32> to vector<8x256xf32>
    %224 = arith.mulf %193, %223 : vector<8x256xf32>
    %225 = arith.addf %224, %222 : vector<8x256xf32>
    %c0_121 = arith.constant 0 : index
    %c0_122 = arith.constant 0 : index
    %c0_123 = arith.constant 0 : index
    %226 = vector.load %arg18[%c0_121, %c0_122, %c0_123] : memref<1x8x256xf32, #tpu.memory_space<vmem>>, vector<1x8x256xf32>
    %227 = vector.shape_cast %226 : vector<1x8x256xf32> to vector<8x256xf32>
    %228 = vector.shape_cast %225 : vector<8x256xf32> to vector<1x8x256xf32>
    tpu.vector_store %arg18[%c0_121, %c0_122, %c0_123], %228 {strides = array<i32>} : memref<1x8x256xf32, #tpu.memory_space<vmem>>, vector<1x8x256xf32>,
    return
  }
  func.func @transform_0(%arg0: i32) -> (i32, i32, i32) {
    %c0_i32 = arith.constant 0 : i32
    %c0_i32_0 = arith.constant 0 : i32
    %c0_i32_1 = arith.constant 0 : i32
    return %arg0, %c0_i32, %c0_i32_0 : i32, i32, i32
  }
  func.func @transform_1(%arg0: i32) -> (i32, i32) {
    %c0_i32 = arith.constant 0 : i32
    %c0_i32_0 = arith.constant 0 : i32
    %c0_i32_1 = arith.constant 0 : i32
    return %c0_i32, %c0_i32_0 : i32, i32
  }
  func.func @transform_2(%arg0: i32) -> (i32, i32) {
    %c0_i32 = arith.constant 0 : i32
    %c0_i32_0 = arith.constant 0 : i32
    %c0_i32_1 = arith.constant 0 : i32
    return %c0_i32, %c0_i32_0 : i32, i32
  }
  func.func @transform_3(%arg0: i32) -> (i32, i32) {
    %c0_i32 = arith.constant 0 : i32
    %c0_i32_0 = arith.constant 0 : i32
    %c0_i32_1 = arith.constant 0 : i32
    return %c0_i32, %c0_i32_0 : i32, i32
  }
  func.func @transform_4(%arg0: i32) -> (i32, i32) {
    %c0_i32 = arith.constant 0 : i32
    %c0_i32_0 = arith.constant 0 : i32
    %c0_i32_1 = arith.constant 0 : i32
    return %c0_i32, %c0_i32_0 : i32, i32
  }
  func.func @transform_5(%arg0: i32) -> (i32, i32) {
    %c0_i32 = arith.constant 0 : i32
    %c0_i32_0 = arith.constant 0 : i32
    %c0_i32_1 = arith.constant 0 : i32
    return %c0_i32, %c0_i32_0 : i32, i32
  }
  func.func @transform_6(%arg0: i32) -> (i32, i32) {
    %c0_i32 = arith.constant 0 : i32
    %c0_i32_0 = arith.constant 0 : i32
    %c0_i32_1 = arith.constant 0 : i32
    return %c0_i32, %c0_i32_0 : i32, i32
  }
  func.func @transform_7(%arg0: i32) -> (i32, i32) {
    %c0_i32 = arith.constant 0 : i32
    %c0_i32_0 = arith.constant 0 : i32
    %c0_i32_1 = arith.constant 0 : i32
    return %c0_i32, %c0_i32_0 : i32, i32
  }
  func.func @transform_8(%arg0: i32) -> (i32, i32) {
    %c0_i32 = arith.constant 0 : i32
    %c0_i32_0 = arith.constant 0 : i32
    %c0_i32_1 = arith.constant 0 : i32
    return %c0_i32, %c0_i32_0 : i32, i32
  }
  func.func @transform_9(%arg0: i32) -> (i32, i32) {
    %c0_i32 = arith.constant 0 : i32
    %c0_i32_0 = arith.constant 0 : i32
    %c0_i32_1 = arith.constant 0 : i32
    return %c0_i32, %c0_i32_0 : i32, i32
  }
  func.func @transform_10(%arg0: i32) -> (i32, i32) {
    %c0_i32 = arith.constant 0 : i32
    %c0_i32_0 = arith.constant 0 : i32
    %c0_i32_1 = arith.constant 0 : i32
    return %c0_i32, %c0_i32_0 : i32, i32
  }
  func.func @transform_11(%arg0: i32) -> (i32, i32) {
    %c0_i32 = arith.constant 0 : i32
    %c0_i32_0 = arith.constant 0 : i32
    %c0_i32_1 = arith.constant 0 : i32
    return %c0_i32, %c0_i32_0 : i32, i32
  }
  func.func @transform_12(%arg0: i32) -> (i32, i32) {
    %c0_i32 = arith.constant 0 : i32
    %c0_i32_0 = arith.constant 0 : i32
    %c0_i32_1 = arith.constant 0 : i32
    return %c0_i32, %c0_i32_0 : i32, i32
  }
  func.func @transform_13(%arg0: i32) -> (i32, i32) {
    %c0_i32 = arith.constant 0 : i32
    %c0_i32_0 = arith.constant 0 : i32
    %c0_i32_1 = arith.constant 0 : i32
    return %c0_i32, %c0_i32_0 : i32, i32
  }
  func.func @transform_14(%arg0: i32) -> (i32, i32) {
    %c0_i32 = arith.constant 0 : i32
    %c0_i32_0 = arith.constant 0 : i32
    %c0_i32_1 = arith.constant 0 : i32
    return %c0_i32, %c0_i32_0 : i32, i32
  }
  func.func @transform_15(%arg0: i32) -> (i32, i32) {
    %c0_i32 = arith.constant 0 : i32
    %c0_i32_0 = arith.constant 0 : i32
    %c0_i32_1 = arith.constant 0 : i32
    return %c0_i32, %c0_i32_0 : i32, i32
  }
  func.func @transform_16(%arg0: i32) -> (i32, i32) {
    %c0_i32 = arith.constant 0 : i32
    %c0_i32_0 = arith.constant 0 : i32
    %c0_i32_1 = arith.constant 0 : i32
    return %c0_i32, %c0_i32_0 : i32, i32
  }
  func.func @transform_17(%arg0: i32) -> (i32, i32, i32) {
    %c0_i32 = arith.constant 0 : i32
    %c0_i32_0 = arith.constant 0 : i32
    %c0_i32_1 = arith.constant 0 : i32
    return %arg0, %c0_i32, %c0_i32_0 : i32, i32, i32
  }
}

</mosaic_0001>

<llo_original>
// kernel: conv_block_forward.1
$region0: #{conv_block_forward.1}
  #allocation0 [shape = 'u32[]', space=smem, size = 0x4, offset = 0x4, fixed_abs, tag = 'smem constant byte address 0x4 - core index']
  #allocation1 [shape = 'u32[144,128]{1,0:T(1,128)}', space=vmem, size = 0x12000, scoped, tag = 'internal scratch']
  #allocation2 [shape = 'f32[8,512]{1,0:T(8,128)}', space=vmem, size = 0x4000, scoped, tag = 'scratch operand']
  #allocation3 [shape = 'f32[1,1]{1,0:T(1,128)S(1)}', space=vmem, size = 0x200, scoped, tag = 'scoped memory for conv_block_forward.1']
  %s0 = inlined_call_operand.vmem [shape: f32[2,4,256], index: 0, kind: input, shape index: {}]
  %s1 = inlined_call_operand.vmem [shape: f32[4,9], index: 1, kind: input, shape index: {}]
  %s2 = inlined_call_operand.vmem [shape: f32[4,1], index: 2, kind: input, shape index: {}]
  %s3 = inlined_call_operand.vmem [shape: f32[8,4], index: 3, kind: input, shape index: {}]
  %s4 = inlined_call_operand.vmem [shape: f32[8,1], index: 4, kind: input, shape index: {}]
  %s5 = inlined_call_operand.vmem [shape: f32[8,1], index: 5, kind: input, shape index: {}]
  %s6 = inlined_call_operand.vmem [shape: f32[8,9], index: 6, kind: input, shape index: {}]
  %s7 = inlined_call_operand.vmem [shape: f32[8,1], index: 7, kind: input, shape index: {}]
  %s8 = inlined_call_operand.vmem [shape: f32[8,8], index: 8, kind: input, shape index: {}]
  %s9 = inlined_call_operand.vmem [shape: f32[8,1], index: 9, kind: input, shape index: {}]
  %s10 = inlined_call_operand.vmem [shape: f32[8,1], index: 10, kind: input, shape index: {}]
  %s11 = inlined_call_operand.vmem [shape: f32[8,1], index: 11, kind: input, shape index: {}]
  %s12 = inlined_call_operand.<no memory space> [shape: f32[1,1], index: 12, kind: input, shape index: {}]
  %s13 = inlined_call_operand.vmem [shape: f32[8,1], index: 13, kind: input, shape index: {}]
  %s14 = inlined_call_operand.vmem [shape: f32[8,1], index: 14, kind: input, shape index: {}]
  %s15 = inlined_call_operand.vmem [shape: f32[8,4], index: 15, kind: input, shape index: {}]
  %s16 = inlined_call_operand.vmem [shape: f32[8,1], index: 16, kind: input, shape index: {}]
  %s17 = inlined_call_operand.vmem [shape: f32[2,8,256], index: 17, kind: output, shape index: {}]
  %s18 = sld [smem:[#allocation0]]
  $region101: #{conv_block_forward.1} parent=0
    _
  %s20 = ssub.s32 1, %s18
  %s21 = scalar_select 0, %s20, %s18
  %v22 = vstv %s12
  %23 = vst [vmem:[#allocation3] sm:$0x1] %v22
  loop: start=0, step=1, limit=4
  $region2: #{conv_block_forward.1} parent=0 // loop_pre_header
    _
  $region3: #{conv_block_forward.1} parent=0 // loop_header
    %s25 = sphi 0, %s29
    %p26 = scmp.ge.s32.totalorder %s25, 4
    %s35 = sphi 0, %s37
    %s38 = sphi 0, %s35
    %s39 = sphi 0, %s38
    %s55 = sphi 0, %s39
    %s59 = sphi 0, %s59
    %s61 = sphi 0, %s59
    %s62 = sphi 0, %s61
    %s76 = sphi 0, %s62
    %s80 = sphi 0, %s80
    %s82 = sphi 0, %s80
    %s83 = sphi 0, %s82
    %s97 = sphi 0, %s83
    %s101 = sphi 0, %s101
    %s103 = sphi 0, %s101
    %s104 = sphi 0, %s103
    %s118 = sphi 0, %s104
    %s122 = sphi 0, %s122
    %s124 = sphi 0, %s122
    %s125 = sphi 0, %s124
    %s139 = sphi 0, %s125
    %s143 = sphi 0, %s143
    %s145 = sphi 0, %s143
    %s146 = sphi 0, %s145
    %s160 = sphi 0, %s146
    %s164 = sphi 0, %s164
    %s166 = sphi 0, %s164
    %s167 = sphi 0, %s166
    %s181 = sphi 0, %s167
    %s185 = sphi 0, %s185
    %s187 = sphi 0, %s185
    %s188 = sphi 0, %s187
    %s202 = sphi 0, %s188
    %s206 = sphi 0, %s206
    %s208 = sphi 0, %s206
    %s209 = sphi 0, %s208
    %s223 = sphi 0, %s209
    %s227 = sphi 0, %s227
    %s229 = sphi 0, %s227
    %s230 = sphi 0, %s229
    %s244 = sphi 0, %s230
    %s248 = sphi 0, %s248
    %s250 = sphi 0, %s248
    %s251 = sphi 0, %s250
    %s265 = sphi 0, %s251
    %s269 = sphi 0, %s269
    %s271 = sphi 0, %s269
    %s272 = sphi 0, %s271
    %s286 = sphi 0, %s272
    %s290 = sphi 0, %s290
    %s292 = sphi 0, %s290
    %s293 = sphi 0, %s292
    %s307 = sphi 0, %s293
    %s311 = sphi 0, %s311
    %s313 = sphi 0, %s311
    %s314 = sphi 0, %s313
    %s328 = sphi 0, %s314
    %s332 = sphi 0, %s332
    %s334 = sphi 0, %s332
    %s335 = sphi 0, %s334
    %s349 = sphi 0, %s335
    %s353 = sphi 0, %s353
    %s355 = sphi 0, %s353
    %s356 = sphi 0, %s355
    %s370 = sphi 0, %s356
    %s374 = sphi 0, %s374
    %s376 = sphi 0, %s374
    %s377 = sphi 0, %s376
    %s391 = sphi 0, %s377
    %s397 = sphi 0, %s399
    %s400 = sphi 0, %s397
    %s401 = sphi 0, %s400
    %s417 = sphi 0, %s401
  $region4: #{conv_block_forward.1} parent=0 // loop_header_branch
    %28 = sbr.rel (%p26) target = $region8
  $region5: #{conv_block_forward.1} parent=0 // loop_body
    %s30 = ssub.s32 %s25, 1
    %s31 = ssub.s32 %s25, 2
    %s32 = sadd.s32 %s25, 1
    %s33 = ssub.s32 %s25, %s32
    %p34 = scmp.eq.s32.totalorder %s33, 0
    %s36 = sadd.s32 %s35, 1
    %s37 = scalar_select %p34, %s35, %s36
    %p40 = pneg %p34
    %p41 = scmp.eq.s32.totalorder %s25, 1
    %p42 = por %p40, %p41
    %p43 = scmp.ne.s32.totalorder %s35, %s38
    %p44 = scmp.eq.s32.totalorder %s25, 0
    %p45 = por %p43, %p44
    %p46 = scmp.ne.s32.totalorder %s35, %s38
    %p47 = scmp.eq.s32.totalorder %s30, 1
    %p48 = por %p46, %p47
    %p49 = scmp.ne.s32.totalorder %s38, %s39
    %p50 = scmp.eq.s32.totalorder %s30, 0
    %p51 = por %p49, %p50
    %p52 = scmp.ne.s32.totalorder %s38, %s39
    %p53 = scmp.eq.s32.totalorder %s31, 1
    %p54 = por %p52, %p53
    %p56 = scmp.ne.s32.totalorder %s39, %s55
    %p57 = scmp.eq.s32.totalorder %s31, 0
    %p58 = por %p56, %p57
    %s60 = sadd.s32 %s59, 1
    %p63 = scmp.eq.s32.totalorder %s25, 1
    %p64 = scmp.ne.s32.totalorder %s59, %s61
    %p65 = scmp.eq.s32.totalorder %s25, 0
    %p66 = por %p64, %p65
    %p67 = scmp.ne.s32.totalorder %s59, %s61
    %p68 = scmp.eq.s32.totalorder %s30, 1
    %p69 = por %p67, %p68
    %p70 = scmp.ne.s32.totalorder %s61, %s62
    %p71 = scmp.eq.s32.totalorder %s30, 0
    %p72 = por %p70, %p71
    %p73 = scmp.ne.s32.totalorder %s61, %s62
    %p74 = scmp.eq.s32.totalorder %s31, 1
    %p75 = por %p73, %p74
    %p77 = scmp.ne.s32.totalorder %s62, %s76
    %p78 = scmp.eq.s32.totalorder %s31, 0
    %p79 = por %p77, %p78
    %s81 = sadd.s32 %s80, 1
    %p84 = scmp.eq.s32.totalorder %s25, 1
    %p85 = scmp.ne.s32.totalorder %s80, %s82
    %p86 = scmp.eq.s32.totalorder %s25, 0
    %p87 = por %p85, %p86
    %p88 = scmp.ne.s32.totalorder %s80, %s82
    %p89 = scmp.eq.s32.totalorder %s30, 1
    %p90 = por %p88, %p89
    %p91 = scmp.ne.s32.totalorder %s82, %s83
    %p92 = scmp.eq.s32.totalorder %s30, 0
    %p93 = por %p91, %p92
    %p94 = scmp.ne.s32.totalorder %s82, %s83
    %p95 = scmp.eq.s32.totalorder %s31, 1
    %p96 = por %p94, %p95
    %p98 = scmp.ne.s32.totalorder %s83, %s97
    %p99 = scmp.eq.s32.totalorder %s31, 0
    %p100 = por %p98, %p99
    %s102 = sadd.s32 %s101, 1
    %p105 = scmp.eq.s32.totalorder %s25, 1
    %p106 = scmp.ne.s32.totalorder %s101, %s103
    %p107 = scmp.eq.s32.totalorder %s25, 0
    %p108 = por %p106, %p107
    %p109 = scmp.ne.s32.totalorder %s101, %s103
    %p110 = scmp.eq.s32.totalorder %s30, 1
    %p111 = por %p109, %p110
    %p112 = scmp.ne.s32.totalorder %s103, %s104
    %p113 = scmp.eq.s32.totalorder %s30, 0
    %p114 = por %p112, %p113
    %p115 = scmp.ne.s32.totalorder %s103, %s104
    %p116 = scmp.eq.s32.totalorder %s31, 1
    %p117 = por %p115, %p116
    %p119 = scmp.ne.s32.totalorder %s104, %s118
    %p120 = scmp.eq.s32.totalorder %s31, 0
    %p121 = por %p119, %p120
    %s123 = sadd.s32 %s122, 1
    %p126 = scmp.eq.s32.totalorder %s25, 1
    %p127 = scmp.ne.s32.totalorder %s122, %s124
    %p128 = scmp.eq.s32.totalorder %s25, 0
    %p129 = por %p127, %p128
    %p130 = scmp.ne.s32.totalorder %s122, %s124
    %p131 = scmp.eq.s32.totalorder %s30, 1
    %p132 = por %p130, %p131
    %p133 = scmp.ne.s32.totalorder %s124, %s125
    %p134 = scmp.eq.s32.totalorder %s30, 0
    %p135 = por %p133, %p134
    %p136 = scmp.ne.s32.totalorder %s124, %s125
    %p137 = scmp.eq.s32.totalorder %s31, 1
    %p138 = por %p136, %p137
    %p140 = scmp.ne.s32.totalorder %s125, %s139
    %p141 = scmp.eq.s32.totalorder %s31, 0
    %p142 = por %p140, %p141
    %s144 = sadd.s32 %s143, 1
    %p147 = scmp.eq.s32.totalorder %s25, 1
    %p148 = scmp.ne.s32.totalorder %s143, %s145
    %p149 = scmp.eq.s32.totalorder %s25, 0
    %p150 = por %p148, %p149
    %p151 = scmp.ne.s32.totalorder %s143, %s145
    %p152 = scmp.eq.s32.totalorder %s30, 1
    %p153 = por %p151, %p152
    %p154 = scmp.ne.s32.totalorder %s145, %s146
    %p155 = scmp.eq.s32.totalorder %s30, 0
    %p156 = por %p154, %p155
    %p157 = scmp.ne.s32.totalorder %s145, %s146
    %p158 = scmp.eq.s32.totalorder %s31, 1
    %p159 = por %p157, %p158
    %p161 = scmp.ne.s32.totalorder %s146, %s160
    %p162 = scmp.eq.s32.totalorder %s31, 0
    %p163 = por %p161, %p162
    %s165 = sadd.s32 %s164, 1
    %p168 = scmp.eq.s32.totalorder %s25, 1
    %p169 = scmp.ne.s32.totalorder %s164, %s166
    %p170 = scmp.eq.s32.totalorder %s25, 0
    %p171 = por %p169, %p170
    %p172 = scmp.ne.s32.totalorder %s164, %s166
    %p173 = scmp.eq.s32.totalorder %s30, 1
    %p174 = por %p172, %p173
    %p175 = scmp.ne.s32.totalorder %s166, %s167
    %p176 = scmp.eq.s32.totalorder %s30, 0
    %p177 = por %p175, %p176
    %p178 = scmp.ne.s32.totalorder %s166, %s167
    %p179 = scmp.eq.s32.totalorder %s31, 1
    %p180 = por %p178, %p179
    %p182 = scmp.ne.s32.totalorder %s167, %s181
    %p183 = scmp.eq.s32.totalorder %s31, 0
    %p184 = por %p182, %p183
    %s186 = sadd.s32 %s185, 1
    %p189 = scmp.eq.s32.totalorder %s25, 1
    %p190 = scmp.ne.s32.totalorder %s185, %s187
    %p191 = scmp.eq.s32.totalorder %s25, 0
    %p192 = por %p190, %p191
    %p193 = scmp.ne.s32.totalorder %s185, %s187
    %p194 = scmp.eq.s32.totalorder %s30, 1
    %p195 = por %p193, %p194
    %p196 = scmp.ne.s32.totalorder %s187, %s188
    %p197 = scmp.eq.s32.totalorder %s30, 0
    %p198 = por %p196, %p197
    %p199 = scmp.ne.s32.totalorder %s187, %s188
    %p200 = scmp.eq.s32.totalorder %s31, 1
    %p201 = por %p199, %p200
    %p203 = scmp.ne.s32.totalorder %s188, %s202
    %p204 = scmp.eq.s32.totalorder %s31, 0
    %p205 = por %p203, %p204
    %s207 = sadd.s32 %s206, 1
    %p210 = scmp.eq.s32.totalorder %s25, 1
    %p211 = scmp.ne.s32.totalorder %s206, %s208
    %p212 = scmp.eq.s32.totalorder %s25, 0
    %p213 = por %p211, %p212
    %p214 = scmp.ne.s32.totalorder %s206, %s208
    %p215 = scmp.eq.s32.totalorder %s30, 1
    %p216 = por %p214, %p215
    %p217 = scmp.ne.s32.totalorder %s208, %s209
    %p218 = scmp.eq.s32.totalorder %s30, 0
    %p219 = por %p217, %p218
    %p220 = scmp.ne.s32.totalorder %s208, %s209
    %p221 = scmp.eq.s32.totalorder %s31, 1
    %p222 = por %p220, %p221
    %p224 = scmp.ne.s32.totalorder %s209, %s223
    %p225 = scmp.eq.s32.totalorder %s31, 0
    %p226 = por %p224, %p225
    %s228 = sadd.s32 %s227, 1
    %p231 = scmp.eq.s32.totalorder %s25, 1
    %p232 = scmp.ne.s32.totalorder %s227, %s229
    %p233 = scmp.eq.s32.totalorder %s25, 0
    %p234 = por %p232, %p233
    %p235 = scmp.ne.s32.totalorder %s227, %s229
    %p236 = scmp.eq.s32.totalorder %s30, 1
    %p237 = por %p235, %p236
    %p238 = scmp.ne.s32.totalorder %s229, %s230
    %p239 = scmp.eq.s32.totalorder %s30, 0
    %p240 = por %p238, %p239
    %p241 = scmp.ne.s32.totalorder %s229, %s230
    %p242 = scmp.eq.s32.totalorder %s31, 1
    %p243 = por %p241, %p242
    %p245 = scmp.ne.s32.totalorder %s230, %s244
    %p246 = scmp.eq.s32.totalorder %s31, 0
    %p247 = por %p245, %p246
    %s249 = sadd.s32 %s248, 1
    %p252 = scmp.eq.s32.totalorder %s25, 1
    %p253 = scmp.ne.s32.totalorder %s248, %s250
    %p254 = scmp.eq.s32.totalorder %s25, 0
    %p255 = por %p253, %p254
    %p256 = scmp.ne.s32.totalorder %s248, %s250
    %p257 = scmp.eq.s32.totalorder %s30, 1
    %p258 = por %p256, %p257
    %p259 = scmp.ne.s32.totalorder %s250, %s251
    %p260 = scmp.eq.s32.totalorder %s30, 0
    %p261 = por %p259, %p260
    %p262 = scmp.ne.s32.totalorder %s250, %s251
    %p263 = scmp.eq.s32.totalorder %s31, 1
    %p264 = por %p262, %p263
    %p266 = scmp.ne.s32.totalorder %s251, %s265
    %p267 = scmp.eq.s32.totalorder %s31, 0
    %p268 = por %p266, %p267
    %s270 = sadd.s32 %s269, 1
    %p273 = scmp.eq.s32.totalorder %s25, 1
    %p274 = scmp.ne.s32.totalorder %s269, %s271
    %p275 = scmp.eq.s32.totalorder %s25, 0
    %p276 = por %p274, %p275
    %p277 = scmp.ne.s32.totalorder %s269, %s271
    %p278 = scmp.eq.s32.totalorder %s30, 1
    %p279 = por %p277, %p278
    %p280 = scmp.ne.s32.totalorder %s271, %s272
    %p281 = scmp.eq.s32.totalorder %s30, 0
    %p282 = por %p280, %p281
    %p283 = scmp.ne.s32.totalorder %s271, %s272
    %p284 = scmp.eq.s32.totalorder %s31, 1
    %p285 = por %p283, %p284
    %p287 = scmp.ne.s32.totalorder %s272, %s286
    %p288 = scmp.eq.s32.totalorder %s31, 0
    %p289 = por %p287, %p288
    %s291 = sadd.s32 %s290, 1
    %p294 = scmp.eq.s32.totalorder %s25, 1
    %p295 = scmp.ne.s32.totalorder %s290, %s292
    %p296 = scmp.eq.s32.totalorder %s25, 0
    %p297 = por %p295, %p296
    %p298 = scmp.ne.s32.totalorder %s290, %s292
    %p299 = scmp.eq.s32.totalorder %s30, 1
    %p300 = por %p298, %p299
    %p301 = scmp.ne.s32.totalorder %s292, %s293
    %p302 = scmp.eq.s32.totalorder %s30, 0
    %p303 = por %p301, %p302
    %p304 = scmp.ne.s32.totalorder %s292, %s293
    %p305 = scmp.eq.s32.totalorder %s31, 1
    %p306 = por %p304, %p305
    %p308 = scmp.ne.s32.totalorder %s293, %s307
    %p309 = scmp.eq.s32.totalorder %s31, 0
    %p310 = por %p308, %p309
    %s312 = sadd.s32 %s311, 1
    %p315 = scmp.eq.s32.totalorder %s25, 1
    %p316 = scmp.ne.s32.totalorder %s311, %s313
    %p317 = scmp.eq.s32.totalorder %s25, 0
    %p318 = por %p316, %p317
    %p319 = scmp.ne.s32.totalorder %s311, %s313
    %p320 = scmp.eq.s32.totalorder %s30, 1
    %p321 = por %p319, %p320
    %p322 = scmp.ne.s32.totalorder %s313, %s314
    %p323 = scmp.eq.s32.totalorder %s30, 0
    %p324 = por %p322, %p323
    %p325 = scmp.ne.s32.totalorder %s313, %s314
    %p326 = scmp.eq.s32.totalorder %s31, 1
    %p327 = por %p325, %p326
    %p329 = scmp.ne.s32.totalorder %s314, %s328
    %p330 = scmp.eq.s32.totalorder %s31, 0
    %p331 = por %p329, %p330
    %s333 = sadd.s32 %s332, 1
    %p336 = scmp.eq.s32.totalorder %s25, 1
    %p337 = scmp.ne.s32.totalorder %s332, %s334
    %p338 = scmp.eq.s32.totalorder %s25, 0
    %p339 = por %p337, %p338
    %p340 = scmp.ne.s32.totalorder %s332, %s334
    %p341 = scmp.eq.s32.totalorder %s30, 1
    %p342 = por %p340, %p341
    %p343 = scmp.ne.s32.totalorder %s334, %s335
    %p344 = scmp.eq.s32.totalorder %s30, 0
    %p345 = por %p343, %p344
    %p346 = scmp.ne.s32.totalorder %s334, %s335
    %p347 = scmp.eq.s32.totalorder %s31, 1
    %p348 = por %p346, %p347
    %p350 = scmp.ne.s32.totalorder %s335, %s349
    %p351 = scmp.eq.s32.totalorder %s31, 0
    %p352 = por %p350, %p351
    %s354 = sadd.s32 %s353, 1
    %p357 = scmp.eq.s32.totalorder %s25, 1
    %p358 = scmp.ne.s32.totalorder %s353, %s355
    %p359 = scmp.eq.s32.totalorder %s25, 0
    %p360 = por %p358, %p359
    %p361 = scmp.ne.s32.totalorder %s353, %s355
    %p362 = scmp.eq.s32.totalorder %s30, 1
    %p363 = por %p361, %p362
    %p364 = scmp.ne.s32.totalorder %s355, %s356
    %p365 = scmp.eq.s32.totalorder %s30, 0
    %p366 = por %p364, %p365
    %p367 = scmp.ne.s32.totalorder %s355, %s356
    %p368 = scmp.eq.s32.totalorder %s31, 1
    %p369 = por %p367, %p368
    %p371 = scmp.ne.s32.totalorder %s356, %s370
    %p372 = scmp.eq.s32.totalorder %s31, 0
    %p373 = por %p371, %p372
    %s375 = sadd.s32 %s374, 1
    %p378 = scmp.eq.s32.totalorder %s25, 1
    %p379 = scmp.ne.s32.totalorder %s374, %s376
    %p380 = scmp.eq.s32.totalorder %s25, 0
    %p381 = por %p379, %p380
    %p382 = scmp.ne.s32.totalorder %s374, %s376
    %p383 = scmp.eq.s32.totalorder %s30, 1
    %p384 = por %p382, %p383
    %p385 = scmp.ne.s32.totalorder %s376, %s377
    %p386 = scmp.eq.s32.totalorder %s30, 0
    %p387 = por %p385, %p386
    %p388 = scmp.ne.s32.totalorder %s376, %s377
    %p389 = scmp.eq.s32.totalorder %s31, 1
    %p390 = por %p388, %p389
    %p392 = scmp.ne.s32.totalorder %s377, %s391
    %p393 = scmp.eq.s32.totalorder %s31, 0
    %p394 = por %p392, %p393
    %s395 = ssub.s32 %s25, %s32
    %p396 = scmp.eq.s32.totalorder %s395, 0
    %s398 = sadd.s32 %s397, 1
    %s399 = scalar_select %p396, %s397, %s398
    %p402 = pneg %p396
    %p403 = scmp.eq.s32.totalorder %s25, 1
    %p404 = por %p402, %p403
    %p405 = scmp.ne.s32.totalorder %s397, %s400
    %p406 = scmp.eq.s32.totalorder %s25, 0
    %p407 = por %p405, %p406
    %p408 = scmp.ne.s32.totalorder %s397, %s400
    %p409 = scmp.eq.s32.totalorder %s30, 1
    %p410 = por %p408, %p409
    %p411 = scmp.ne.s32.totalorder %s400, %s401
    %p412 = scmp.eq.s32.totalorder %s30, 0
    %p413 = por %p411, %p412
    %p414 = scmp.ne.s32.totalorder %s400, %s401
    %p415 = scmp.eq.s32.totalorder %s31, 1
    %p416 = por %p414, %p415
    %p418 = scmp.ne.s32.totalorder %s401, %s417
    %p419 = scmp.eq.s32.totalorder %s31, 0
    %p420 = por %p418, %p419
    %p421 = scmp.le.s32.totalorder 1, %s25
    %p422 = scmp.lt.s32.totalorder %s25, 3
    %p423 = pnand %p421, %p422
    %p424 = pneg %p423
    // Predicated region
    $region9: #{conv_block_forward.1} parent=5 // pred_check
      _
    $region10: #{conv_block_forward.1} parent=5 // pred_check_branch
      %426 = sbr.rel (%p423) target = $region12
    $region11: #{conv_block_forward.1} parent=5 // pred_region
      %s427 = ssub.s32 %s25, 1
      // Predicated region
      $region13: #{conv_block_forward.1} parent=11 // pred_check
        %p428 = pneg %p72
      $region14: #{conv_block_forward.1} parent=11 // pred_check_branch
        %430 = sbr.rel (%p428) target = $region16
      $region15: #{conv_block_forward.1} parent=11 // pred_region
        _
      $region16: #{conv_block_forward.1} parent=11 // pred_fallthru
        _
      // Predicated region
      $region17: #{conv_block_forward.1} parent=11 // pred_check
        %p431 = pneg %p93
      $region18: #{conv_block_forward.1} parent=11 // pred_check_branch
        %433 = sbr.rel (%p431) target = $region20
      $region19: #{conv_block_forward.1} parent=11 // pred_region
        _
      $region20: #{conv_block_forward.1} parent=11 // pred_fallthru
        _
      // Predicated region
      $region21: #{conv_block_forward.1} parent=11 // pred_check
        %p434 = pneg %p114
      $region22: #{conv_block_forward.1} parent=11 // pred_check_branch
        %436 = sbr.rel (%p434) target = $region24
      $region23: #{conv_block_forward.1} parent=11 // pred_region
        _
      $region24: #{conv_block_forward.1} parent=11 // pred_fallthru
        _
      // Predicated region
      $region25: #{conv_block_forward.1} parent=11 // pred_check
        %p437 = pneg %p135
      $region26: #{conv_block_forward.1} parent=11 // pred_check_branch
        %439 = sbr.rel (%p437) target = $region28
      $region27: #{conv_block_forward.1} parent=11 // pred_region
        _
      $region28: #{conv_block_forward.1} parent=11 // pred_fallthru
        _
      // Predicated region
      $region29: #{conv_block_forward.1} parent=11 // pred_check
        %p440 = pneg %p156
      $region30: #{conv_block_forward.1} parent=11 // pred_check_branch
        %442 = sbr.rel (%p440) target = $region32
      $region31: #{conv_block_forward.1} parent=11 // pred_region
        _
      $region32: #{conv_block_forward.1} parent=11 // pred_fallthru
        _
      // Predicated region
      $region33: #{conv_block_forward.1} parent=11 // pred_check
        %p443 = pneg %p177
      $region34: #{conv_block_forward.1} parent=11 // pred_check_branch
        %445 = sbr.rel (%p443) target = $region36
      $region35: #{conv_block_forward.1} parent=11 // pred_region
        _
      $region36: #{conv_block_forward.1} parent=11 // pred_fallthru
        _
      // Predicated region
      $region37: #{conv_block_forward.1} parent=11 // pred_check
        %p446 = pneg %p198
      $region38: #{conv_block_forward.1} parent=11 // pred_check_branch
        %448 = sbr.rel (%p446) target = $region40
      $region39: #{conv_block_forward.1} parent=11 // pred_region
        _
      $region40: #{conv_block_forward.1} parent=11 // pred_fallthru
        _
      // Predicated region
      $region41: #{conv_block_forward.1} parent=11 // pred_check
        %p449 = pneg %p219
      $region42: #{conv_block_forward.1} parent=11 // pred_check_branch
        %451 = sbr.rel (%p449) target = $region44
      $region43: #{conv_block_forward.1} parent=11 // pred_region
        _
      $region44: #{conv_block_forward.1} parent=11 // pred_fallthru
        _
      // Predicated region
      $region45: #{conv_block_forward.1} parent=11 // pred_check
        %p452 = pneg %p240
      $region46: #{conv_block_forward.1} parent=11 // pred_check_branch
        %454 = sbr.rel (%p452) target = $region48
      $region47: #{conv_block_forward.1} parent=11 // pred_region
        _
      $region48: #{conv_block_forward.1} parent=11 // pred_fallthru
        _
      // Predicated region
      $region49: #{conv_block_forward.1} parent=11 // pred_check
        %p455 = pneg %p261
      $region50: #{conv_block_forward.1} parent=11 // pred_check_branch
        %457 = sbr.rel (%p455) target = $region52
      $region51: #{conv_block_forward.1} parent=11 // pred_region
        _
      $region52: #{conv_block_forward.1} parent=11 // pred_fallthru
        _
      // Predicated region
      $region53: #{conv_block_forward.1} parent=11 // pred_check
        %p458 = pneg %p282
      $region54: #{conv_block_forward.1} parent=11 // pred_check_branch
        %460 = sbr.rel (%p458) target = $region56
      $region55: #{conv_block_forward.1} parent=11 // pred_region
        _
      $region56: #{conv_block_forward.1} parent=11 // pred_fallthru
        _
      // Predicated region
      $region57: #{conv_block_forward.1} parent=11 // pred_check
        %p461 = pneg %p303
      $region58: #{conv_block_forward.1} parent=11 // pred_check_branch
        %463 = sbr.rel (%p461) target = $region60
      $region59: #{conv_block_forward.1} parent=11 // pred_region
        _
      $region60: #{conv_block_forward.1} parent=11 // pred_fallthru
        _
      // Predicated region
      $region61: #{conv_block_forward.1} parent=11 // pred_check
        %p464 = pneg %p324
      $region62: #{conv_block_forward.1} parent=11 // pred_check_branch
        %466 = sbr.rel (%p464) target = $region64
      $region63: #{conv_block_forward.1} parent=11 // pred_region
        _
      $region64: #{conv_block_forward.1} parent=11 // pred_fallthru
        _
      // Predicated region
      $region65: #{conv_block_forward.1} parent=11 // pred_check
        %p467 = pneg %p345
      $region66: #{conv_block_forward.1} parent=11 // pred_check_branch
        %469 = sbr.rel (%p467) target = $region68
      $region67: #{conv_block_forward.1} parent=11 // pred_region
        _
      $region68: #{conv_block_forward.1} parent=11 // pred_fallthru
        _
      // Predicated region
      $region69: #{conv_block_forward.1} parent=11 // pred_check
        %p470 = pneg %p366
      $region70: #{conv_block_forward.1} parent=11 // pred_check_branch
        %472 = sbr.rel (%p470) target = $region72
      $region71: #{conv_block_forward.1} parent=11 // pred_region
        _
      $region72: #{conv_block_forward.1} parent=11 // pred_fallthru
        _
      // Predicated region
      $region73: #{conv_block_forward.1} parent=11 // pred_check
        %p473 = pneg %p387
      $region74: #{conv_block_forward.1} parent=11 // pred_check_branch
        %475 = sbr.rel (%p473) target = $region76
      $region75: #{conv_block_forward.1} parent=11 // pred_region
        _
      $region76: #{conv_block_forward.1} parent=11 // pred_fallthru
        _
    $region12: #{conv_block_forward.1} parent=5 // pred_fallthru
      _
    %p476 = scmp.lt.s32.totalorder %s25, 2
    // Predicated region
    $region77: #{conv_block_forward.1} parent=5 // pred_check
      %p477 = pneg %p476
    $region78: #{conv_block_forward.1} parent=5 // pred_check_branch
      %479 = sbr.rel (%p477) target = $region80
    $region79: #{conv_block_forward.1} parent=5 // pred_region
      // Predicated region
      $region81: #{conv_block_forward.1} parent=79 // pred_check
        %p480 = pneg %p45
      $region82: #{conv_block_forward.1} parent=79 // pred_check_branch
        %482 = sbr.rel (%p480) target = $region84
      $region83: #{conv_block_forward.1} parent=79 // pred_region
        %p483 = scmp.lt.s32.totalorder %s25, 1
        %s484 = scalar_select %p483, %s25, 1
        %s485 = smul.addr %s484, 2
        %s486 = smul.addr %s485, 4
        %s487 = scalar_lea.vmem %s0, %s486
      $region84: #{conv_block_forward.1} parent=79 // pred_fallthru
        _
    $region80: #{conv_block_forward.1} parent=5 // pred_fallthru
      _
    %p488 = scmp.le.s32.totalorder 1, %s25
    %p489 = scmp.lt.s32.totalorder %s25, 3
    %p490 = pnand %p488, %p489
    %p491 = pneg %p490
    // Predicated region
    $region85: #{conv_block_forward.1} parent=5 // pred_check
      _
    $region86: #{conv_block_forward.1} parent=5 // pred_check_branch
      %493 = sbr.rel (%p490) target = $region88
    $region87: #{conv_block_forward.1} parent=5 // pred_region
      %s494 = ssub.s32 %s25, 1
      %p495 = scmp.lt.s32.totalorder %s30, 1
      %s496 = scalar_select %p495, %s30, 1
      %s497 = smul.addr %s496, 2
      %s498 = smul.addr %s497, 4
      %s499 = scalar_lea.vmem %s0, %s498
      %p500 = pneg %p51
      %p501 = pneg %p48
      %p502 = pneg %p72
      %p503 = pneg %p69
      %p504 = pneg %p93
      %p505 = pneg %p90
      %p506 = pneg %p114
      %p507 = pneg %p111
      %p508 = pneg %p135
      %p509 = pneg %p132
      %p510 = pneg %p156
      %p511 = pneg %p153
      %p512 = pneg %p177
      %p513 = pneg %p174
      %p514 = pneg %p198
      %p515 = pneg %p195
      %p516 = pneg %p219
      %p517 = pneg %p216
      %p518 = pneg %p240
      %p519 = pneg %p237
      %p520 = pneg %p261
      %p521 = pneg %p258
      %p522 = pneg %p282
      %p523 = pneg %p279
      %p524 = pneg %p303
      %p525 = pneg %p300
      %p526 = pneg %p324
      %p527 = pneg %p321
      %p528 = pneg %p345
      %p529 = pneg %p342
      %p530 = pneg %p366
      %p531 = pneg %p363
      %p532 = pneg %p387
      %p533 = pneg %p384
      %p534 = pneg %p413
      %p535 = pneg %p410
      %p536 = scmp.lt.s32.totalorder %s30, 1
      %s537 = scalar_select %p536, %s30, 1
      %s538 = smul.addr %s537, 2
      %s539 = smul.addr %s538, 8
      %s540 = scalar_lea.vmem %s17, %s539
      %p541 = scmp.lt.s32.totalorder %s30, 1
      %s542 = scalar_select %p541, %s30, 1
      %s543 = smul.addr %s542, 2
      %s544 = smul.addr %s543, 4
      %s545 = scalar_lea.vmem %s0, %s544
      %p546 = scmp.lt.s32.totalorder %s30, 1
      %s547 = scalar_select %p546, %s30, 1
      %s548 = smul.addr %s547, 2
      %s549 = smul.addr %s548, 8
      %s550 = scalar_lea.vmem %s17, %s549
      %551 = vst [vmem:[#allocation2] sm:$0xff] 0.0
      %552 = vst [vmem:[#allocation2 + $0x18] sm:$0xff] 0.0
      %v553 = vlaneseq
      %v554 = vand.u32 %v553, 127
      %v555 = vadd.s32 %v554, 128
      %vm556 = vcmp.lt.s32.totalorder %v554, 0
      %v557 = vsub.s32 0, %v554
      %v558 = vsel %vm556, %v557, %v554
      %v559 = vshrl.u32 %v558, 4
      %v560 = vand.u32 %v558, 15
      %v561 = vsub.s32 0, %v560
      %v562 = vsel %vm556, %v561, %v560
      %vm563 = vcmp.lt.s32.totalorder %v555, 0
      %v564 = vsub.s32 0, %v555
      %v565 = vsel %vm563, %v564, %v555
      %v566 = vshrl.u32 %v565, 4
      %v567 = vand.u32 %v565, 15
      %v568 = vsub.s32 0, %v567
      %v569 = vsel %vm563, %v568, %v567
      %vm570 = vcmp.ne.s32.totalorder %v562, 0
      %vm571 = vcmp.ne.s32.totalorder %v569, 0
      %vm572 = vcmp.lt.s32.totalorder %v562, 0
      %vm573 = vcmp.lt.s32.totalorder %v569, 0
      %vm574 = vmand %vm572, %vm570
      %vm575 = vmand %vm573, %vm571
      %v576 = vadd.s32 %v562, 16
      %v577 = vadd.s32 %v569, 16
      %v578 = vsel %vm574, %v576, %v562
      %v579 = vsel %vm575, %v577, %v569
      %vm580 = vcmp.ne.s32.totalorder %v578, 0
      %vm581 = vcmp.ne.s32.totalorder %v579, 0
      %vm582 = vcmp.ne.s32.totalorder %v578, 15
      %vm583 = vcmp.ne.s32.totalorder %v579, 15
      %v584 = vld [vmem:[%s545] sm:$0xff]
      %v586 = vcombine.high %v584, %v584
      %588 = vst [vmem:[#allocation2 + $0x8] sm:$0xf] %v584
      %589 = vst [vmem:[#allocation2 + $0x10] sm:$0xf] %v586
      %v590 = vld [vmem:[#allocation2] sm:$0xf]
      %v591 = vld [vmem:[#allocation2 + $0x8] sm:$0xf]
      %v592 = vld [vmem:[#allocation2 + $0x10] sm:$0xf]
      %v593 = vsel %vm580, 1, 0
      %v594 = vsel %vm581, 1, 0
      %vm595 = vcmp.eq.s32.totalorder %v593, 1
      %vm596 = vcmp.eq.s32.totalorder %v594, 1
      %600 = vrot.lane.b32.xlu0 %v590, 17
      %v601 = vpop.permute.xlu0 %600
      %602 = vrot.lane.b32.xlu0 %v591, 17
      %v603 = vpop.permute.xlu0 %602
      %604 = vrot.lane.b32.xlu0 %v592, 17
      %v605 = vpop.permute.xlu0 %604
      %vm606 = vcmask 138240
      %v607 = vsel %vm606, %v601, %v603
      %v608 = vsel %vm606, %v603, %v605
      %v611 = vsel %vm595, %v607, 0.0
      %v612 = vsel %vm596, %v608, 0.0
      %v613 = vld [vmem:[%s1] sm:$0xf]
      %615 = vset.pattern.permute.xlu0 0
      %616 = vperm.xlu0 %615, %v613
      %v617 = vpop.permute.xlu0 %616
      %v619 = vmul.f32 %v611, %v617
      %v620 = vmul.f32 %v612, %v617
      %v621 = vadd.f32 %v619, 0.0
      %v622 = vadd.f32 %v620, 0.0
      %623 = vset.pattern.permute.xlu0 1
      %624 = vperm.xlu0 %623, %v613
      %v625 = vpop.permute.xlu0 %624
      %v627 = vmul.f32 %v590, %v625
      %v628 = vmul.f32 %v591, %v625
      %v629 = vmul.f32 %v592, %v625
      %633 = vrot.lane.b32.xlu0 %v627, 16
      %v634 = vpop.permute.xlu0 %633
      %635 = vrot.lane.b32.xlu0 %v628, 16
      %v636 = vpop.permute.xlu0 %635
      %637 = vrot.lane.b32.xlu0 %v629, 16
      %v638 = vpop.permute.xlu0 %637
      %vm639 = vcmask 130048
      %v640 = vsel %vm639, %v634, %v636
      %v641 = vsel %vm639, %v636, %v638
      %v644 = vadd.f32 %v621, %v640
      %v645 = vadd.f32 %v622, %v641
      %v646 = vsel %vm582, 1, 0
      %v647 = vsel %vm583, 1, 0
      %vm648 = vcmp.eq.s32.totalorder %v646, 1
      %vm649 = vcmp.eq.s32.totalorder %v647, 1
      %650 = vrot.lane.b32.xlu0 %v590, 15
      %v651 = vpop.permute.xlu0 %650
      %652 = vrot.lane.b32.xlu0 %v591, 15
      %v653 = vpop.permute.xlu0 %652
      %654 = vrot.lane.b32.xlu0 %v592, 15
      %v655 = vpop.permute.xlu0 %654
      %vm656 = vcmask 121856
      %v657 = vsel %vm656, %v651, %v653
      %v658 = vsel %vm656, %v653, %v655
      %v661 = vsel %vm648, %v657, 0.0
      %v662 = vsel %vm649, %v658, 0.0
      %663 = vset.pattern.permute.xlu0 2
      %664 = vperm.xlu0 %663, %v613
      %v665 = vpop.permute.xlu0 %664
      %v667 = vmul.f32 %v661, %v665
      %v668 = vmul.f32 %v662, %v665
      %v669 = vadd.f32 %v644, %v667
      %v670 = vadd.f32 %v645, %v668
      %671 = vrot.lane.b32.xlu0 %v590, 1
      %v672 = vpop.permute.xlu0 %671
      %673 = vrot.lane.b32.xlu0 %v591, 1
      %v674 = vpop.permute.xlu0 %673
      %675 = vrot.lane.b32.xlu0 %v592, 1
      %v676 = vpop.permute.xlu0 %675
      %vm677 = vcmask 7168
      %v678 = vsel %vm677, %v672, %v674
      %v679 = vsel %vm677, %v674, %v676
      %v682 = vsel %vm595, %v678, 0.0
      %v683 = vsel %vm596, %v679, 0.0
      %684 = vset.pattern.permute.xlu0 3
      %685 = vperm.xlu0 %684, %v613
      %v686 = vpop.permute.xlu0 %685
      %v688 = vmul.f32 %v682, %v686
      %v689 = vmul.f32 %v683, %v686
      %v690 = vadd.f32 %v669, %v688
      %v691 = vadd.f32 %v670, %v689
      %692 = vset.pattern.permute.xlu0 4
      %693 = vperm.xlu0 %692, %v613
      %v694 = vpop.permute.xlu0 %693
      %v696 = vmul.f32 %v591, %v694
      %v697 = vmul.f32 %v592, %v694
      %v698 = vadd.f32 %v690, %v696
      %v699 = vadd.f32 %v691, %v697
      %v700 = vld [vmem:[#allocation2 + $0x8] sm:$0xf]
      %v701 = vld [vmem:[#allocation2 + $0x10] sm:$0xf]
      %v702 = vld [vmem:[#allocation2 + $0x18] sm:$0xf]
      %706 = vrot.lane.b32.xlu0 %v700, 127
      %v707 = vpop.permute.xlu0 %706
      %708 = vrot.lane.b32.xlu0 %v701, 127
      %v709 = vpop.permute.xlu0 %708
      %710 = vrot.lane.b32.xlu0 %v702, 127
      %v711 = vpop.permute.xlu0 %710
      %vm712 = vcmask 1039360
      %v713 = vsel %vm712, %v707, %v709
      %v714 = vsel %vm712, %v709, %v711
      %v717 = vsel %vm648, %v713, 0.0
      %v718 = vsel %vm649, %v714, 0.0
      %719 = vset.pattern.permute.xlu0 5
      %720 = vperm.xlu0 %719, %v613
      %v721 = vpop.permute.xlu0 %720
      %v723 = vmul.f32 %v717, %v721
      %v724 = vmul.f32 %v718, %v721
      %v725 = vadd.f32 %v698, %v723
      %v726 = vadd.f32 %v699, %v724
      %727 = vrot.lane.b32.xlu0 %v700, 113
      %v728 = vpop.permute.xlu0 %727
      %729 = vrot.lane.b32.xlu0 %v701, 113
      %v730 = vpop.permute.xlu0 %729
      %731 = vrot.lane.b32.xlu0 %v702, 113
      %v732 = vpop.permute.xlu0 %731
      %vm733 = vcmask 924672
      %v734 = vsel %vm733, %v728, %v730
      %v735 = vsel %vm733, %v730, %v732
      %v738 = vsel %vm595, %v734, 0.0
      %v739 = vsel %vm596, %v735, 0.0
      %740 = vset.pattern.permute.xlu0 6
      %741 = vperm.xlu0 %740, %v613
      %v742 = vpop.permute.xlu0 %741
      %v744 = vmul.f32 %v738, %v742
      %v745 = vmul.f32 %v739, %v742
      %v746 = vadd.f32 %v725, %v744
      %v747 = vadd.f32 %v726, %v745
      %748 = vset.pattern.permute.xlu0 7
      %749 = vperm.xlu0 %748, %v613
      %v750 = vpop.permute.xlu0 %749
      %v752 = vmul.f32 %v700, %v750
      %v753 = vmul.f32 %v701, %v750
      %v754 = vmul.f32 %v702, %v750
      %758 = vrot.lane.b32.xlu0 %v752, 112
      %v759 = vpop.permute.xlu0 %758
      %760 = vrot.lane.b32.xlu0 %v753, 112
      %v761 = vpop.permute.xlu0 %760
      %762 = vrot.lane.b32.xlu0 %v754, 112
      %v763 = vpop.permute.xlu0 %762
      %vm764 = vcmask 916480
      %v765 = vsel %vm764, %v759, %v761
      %v766 = vsel %vm764, %v761, %v763
      %v769 = vadd.f32 %v746, %v765
      %v770 = vadd.f32 %v747, %v766
      %771 = vrot.lane.b32.xlu0 %v700, 111
      %v772 = vpop.permute.xlu0 %771
      %773 = vrot.lane.b32.xlu0 %v701, 111
      %v774 = vpop.permute.xlu0 %773
      %775 = vrot.lane.b32.xlu0 %v702, 111
      %v776 = vpop.permute.xlu0 %775
      %vm777 = vcmask 908288
      %v778 = vsel %vm777, %v772, %v774
      %v779 = vsel %vm777, %v774, %v776
      %v782 = vsel %vm648, %v778, 0.0
      %v783 = vsel %vm649, %v779, 0.0
      %784 = vset.pattern.permute.xlu0 8
      %785 = vperm.xlu0 %784, %v613
      %v786 = vpop.permute.xlu0 %785
      %v788 = vmul.f32 %v782, %v786
      %v789 = vmul.f32 %v783, %v786
      %v790 = vadd.f32 %v769, %v788
      %v791 = vadd.f32 %v770, %v789
      %v792 = vld [vmem:[%s2] sm:$0xf]
      %794 = vset.pattern.permute.xlu0 0
      %795 = vperm.xlu0 %794, %v792
      %v796 = vpop.permute.xlu0 %795
      %v798 = vadd.f32 %v790, %v796
      %v799 = vadd.f32 %v791, %v796
      %v800 = vld [vmem:[%s3] sm:$0xff]
      %vm801 = vcmask 31744
      %v803 = vsel %vm801, %v800, 0
      %vm805 = vcmask 1043456
      %v807 = vsel %vm805, %v798, 0
      %v810 = vsel %vm805, %v799, 0
      %812 = vmatprep.subr.mxu0 %v810
      %813 = vmatpush1.msra.mxu0 %v807
      %814 = vmatprep.subr.mxu0 0.0
      %815 = vmatpush1.msra.mxu0 0.0
      %816 = vmatprep.subr.mxu0 0.0
      %817 = vmatpush1.msra.mxu0 0.0
      %818 = vmatprep.subr.mxu0 0.0
      %819 = vmatpush1.msra.mxu0 0.0
      %820 = vmatprep.subr.mxu0 0.0
      %821 = vmatpush1.msra.mxu0 0.0
      %822 = vmatprep.subr.mxu0 0.0
      %823 = vmatpush1.msra.mxu0 0.0
      %824 = vmatprep.subr.mxu0 0.0
      %825 = vmatpush1.msra.mxu0 0.0
      %826 = vmatprep.subr.mxu0 0.0
      %827 = vmatpush1.msra.mxu0 0.0
      %828 = vmatprep.subr.mxu0 0.0
      %829 = vmatpush1.msra.mxu0 0.0
      %830 = vmatprep.subr.mxu0 0.0
      %831 = vmatpush1.msra.mxu0 0.0
      %832 = vmatprep.subr.mxu0 0.0
      %833 = vmatpush1.msra.mxu0 0.0
      %834 = vmatprep.subr.mxu0 0.0
      %835 = vmatpush1.msra.mxu0 0.0
      %836 = vmatprep.subr.mxu0 0.0
      %837 = vmatpush1.msra.mxu0 0.0
      %838 = vmatprep.subr.mxu0 0.0
      %839 = vmatpush1.msra.mxu0 0.0
      %840 = vmatprep.subr.mxu0 0.0
      %841 = vmatpush1.msra.mxu0 0.0
      %842 = vmatprep.subr.mxu0 0.0
      %843 = vmatpush1.msra.mxu0 0.0
      %844 = vmatprep.subr.mxu0 0.0
      %845 = vmatpush1.msra.mxu0 0.0
      %846 = vmatprep.subr.mxu0 0.0
      %847 = vmatpush1.msra.mxu0 0.0
      %848 = vmatprep.subr.mxu0 0.0
      %849 = vmatpush1.msra.mxu0 0.0
      %850 = vmatprep.subr.mxu0 0.0
      %851 = vmatpush1.msra.mxu0 0.0
      %852 = vmatprep.subr.mxu0 0.0
      %853 = vmatpush1.msra.mxu0 0.0
      %854 = vmatprep.subr.mxu0 0.0
      %855 = vmatpush1.msra.mxu0 0.0
      %856 = vmatprep.subr.mxu0 0.0
      %857 = vmatpush1.msra.mxu0 0.0
      %858 = vmatprep.subr.mxu0 0.0
      %859 = vmatpush1.msra.mxu0 0.0
      %860 = vmatprep.subr.mxu0 0.0
      %861 = vmatpush1.msra.mxu0 0.0
      %862 = vmatprep.subr.mxu0 0.0
      %863 = vmatpush1.msra.mxu0 0.0
      %864 = vmatprep.subr.mxu0 0.0
      %865 = vmatpush1.msra.mxu0 0.0
      %866 = vmatprep.subr.mxu0 0.0
      %867 = vmatpush1.msra.mxu0 0.0
      %868 = vmatprep.subr.mxu0 0.0
      %869 = vmatpush1.msra.mxu0 0.0
      %870 = vmatprep.subr.mxu0 0.0
      %871 = vmatpush1.msra.mxu0 0.0
      %872 = vmatprep.subr.mxu0 0.0
      %873 = vmatpush1.msra.mxu0 0.0
      %874 = vmatprep.subr.mxu0 0.0
      %875 = vmatpush1.msra.mxu0 0.0
      %876 = vmatprep.mubr.f32.mxu0 0.0
      %877 = vmatmul.mubr.f32.gmra.mrb[0].mxu0 %v803
      %v878 = vpop.f32.mrb[0].mxu0
      %v879 = vadd.f32 0.0, %v878
      %v880 = vpop.f32.mrb[0].mxu0
      %v881 = vadd.f32 0.0, %v880
      %882 = vdwg.mxu0
      %v883 = vld [vmem:[%s4] sm:$0xff]
      %885 = vset.pattern.permute.xlu0 0
      %886 = vperm.xlu0 %885, %v883
      %v887 = vpop.permute.xlu0 %886
      %v889 = vmul.f32 %v879, %v887
      %v890 = vmul.f32 %v881, %v887
      %v891 = vld [vmem:[%s5] sm:$0xff]
      %893 = vset.pattern.permute.xlu0 0
      %894 = vperm.xlu0 %893, %v891
      %v895 = vpop.permute.xlu0 %894
      %v897 = vadd.f32 %v889, %v895
      %v898 = vadd.f32 %v890, %v895
      %v899 = vmax.f32 %v897, 0.0
      %v900 = vmax.f32 %v898, 0.0
      %901 = vst [vmem:[#allocation2 + $0x8] sm:$0xff] %v899
      %902 = vst [vmem:[#allocation2 + $0x10] sm:$0xff] %v900
      %v903 = vld [vmem:[#allocation2] sm:$0xff]
      %v904 = vld [vmem:[#allocation2 + $0x8] sm:$0xff]
      %v905 = vld [vmem:[#allocation2 + $0x10] sm:$0xff]
      %909 = vrot.lane.b32.xlu0 %v903, 17
      %v910 = vpop.permute.xlu0 %909
      %911 = vrot.lane.b32.xlu0 %v904, 17
      %v912 = vpop.permute.xlu0 %911
      %913 = vrot.lane.b32.xlu0 %v905, 17
      %v914 = vpop.permute.xlu0 %913
      %v915 = vsel %vm606, %v910, %v912
      %v916 = vsel %vm606, %v912, %v914
      %v919 = vsel %vm595, %v915, 0.0
      %v920 = vsel %vm596, %v916, 0.0
      %v921 = vld [vmem:[%s6] sm:$0xff]
      %923 = vset.pattern.permute.xlu0 0
      %924 = vperm.xlu0 %923, %v921
      %v925 = vpop.permute.xlu0 %924
      %v927 = vmul.f32 %v919, %v925
      %v928 = vmul.f32 %v920, %v925
      %v929 = vadd.f32 %v927, 0.0
      %v930 = vadd.f32 %v928, 0.0
      %931 = vset.pattern.permute.xlu0 1
      %932 = vperm.xlu0 %931, %v921
      %v933 = vpop.permute.xlu0 %932
      %v935 = vmul.f32 %v903, %v933
      %v936 = vmul.f32 %v904, %v933
      %v937 = vmul.f32 %v905, %v933
      %941 = vrot.lane.b32.xlu0 %v935, 16
      %v942 = vpop.permute.xlu0 %941
      %943 = vrot.lane.b32.xlu0 %v936, 16
      %v944 = vpop.permute.xlu0 %943
      %945 = vrot.lane.b32.xlu0 %v937, 16
      %v946 = vpop.permute.xlu0 %945
      %v947 = vsel %vm639, %v942, %v944
      %v948 = vsel %vm639, %v944, %v946
      %v951 = vadd.f32 %v929, %v947
      %v952 = vadd.f32 %v930, %v948
      %953 = vrot.lane.b32.xlu0 %v903, 15
      %v954 = vpop.permute.xlu0 %953
      %955 = vrot.lane.b32.xlu0 %v904, 15
      %v956 = vpop.permute.xlu0 %955
      %957 = vrot.lane.b32.xlu0 %v905, 15
      %v958 = vpop.permute.xlu0 %957
      %v959 = vsel %vm656, %v954, %v956
      %v960 = vsel %vm656, %v956, %v958
      %v963 = vsel %vm648, %v959, 0.0
      %v964 = vsel %vm649, %v960, 0.0
      %965 = vset.pattern.permute.xlu0 2
      %966 = vperm.xlu0 %965, %v921
      %v967 = vpop.permute.xlu0 %966
      %v969 = vmul.f32 %v963, %v967
      %v970 = vmul.f32 %v964, %v967
      %v971 = vadd.f32 %v951, %v969
      %v972 = vadd.f32 %v952, %v970
      %973 = vrot.lane.b32.xlu0 %v903, 1
      %v974 = vpop.permute.xlu0 %973
      %975 = vrot.lane.b32.xlu0 %v904, 1
      %v976 = vpop.permute.xlu0 %975
      %977 = vrot.lane.b32.xlu0 %v905, 1
      %v978 = vpop.permute.xlu0 %977
      %v979 = vsel %vm677, %v974, %v976
      %v980 = vsel %vm677, %v976, %v978
      %v983 = vsel %vm595, %v979, 0.0
      %v984 = vsel %vm596, %v980, 0.0
      %985 = vset.pattern.permute.xlu0 3
      %986 = vperm.xlu0 %985, %v921
      %v987 = vpop.permute.xlu0 %986
      %v989 = vmul.f32 %v983, %v987
      %v990 = vmul.f32 %v984, %v987
      %v991 = vadd.f32 %v971, %v989
      %v992 = vadd.f32 %v972, %v990
      %993 = vset.pattern.permute.xlu0 4
      %994 = vperm.xlu0 %993, %v921
      %v995 = vpop.permute.xlu0 %994
      %v997 = vmul.f32 %v904, %v995
      %v998 = vmul.f32 %v905, %v995
      %v999 = vadd.f32 %v991, %v997
      %v1000 = vadd.f32 %v992, %v998
      %v1001 = vld [vmem:[#allocation2 + $0x8] sm:$0xff]
      %v1002 = vld [vmem:[#allocation2 + $0x10] sm:$0xff]
      %v1003 = vld [vmem:[#allocation2 + $0x18] sm:$0xff]
      %1007 = vrot.lane.b32.xlu0 %v1001, 127
      %v1008 = vpop.permute.xlu0 %1007
      %1009 = vrot.lane.b32.xlu0 %v1002, 127
      %v1010 = vpop.permute.xlu0 %1009
      %1011 = vrot.lane.b32.xlu0 %v1003, 127
      %v1012 = vpop.permute.xlu0 %1011
      %v1013 = vsel %vm712, %v1008, %v1010
      %v1014 = vsel %vm712, %v1010, %v1012
      %v1017 = vsel %vm648, %v1013, 0.0
      %v1018 = vsel %vm649, %v1014, 0.0
      %1019 = vset.pattern.permute.xlu0 5
      %1020 = vperm.xlu0 %1019, %v921
      %v1021 = vpop.permute.xlu0 %1020
      %v1023 = vmul.f32 %v1017, %v1021
      %v1024 = vmul.f32 %v1018, %v1021
      %v1025 = vadd.f32 %v999, %v1023
      %v1026 = vadd.f32 %v1000, %v1024
      %1027 = vrot.lane.b32.xlu0 %v1001, 113
      %v1028 = vpop.permute.xlu0 %1027
      %1029 = vrot.lane.b32.xlu0 %v1002, 113
      %v1030 = vpop.permute.xlu0 %1029
      %1031 = vrot.lane.b32.xlu0 %v1003, 113
      %v1032 = vpop.permute.xlu0 %1031
      %v1033 = vsel %vm733, %v1028, %v1030
      %v1034 = vsel %vm733, %v1030, %v1032
      %v1037 = vsel %vm595, %v1033, 0.0
      %v1038 = vsel %vm596, %v1034, 0.0
      %1039 = vset.pattern.permute.xlu0 6
      %1040 = vperm.xlu0 %1039, %v921
      %v1041 = vpop.permute.xlu0 %1040
      %v1043 = vmul.f32 %v1037, %v1041
      %v1044 = vmul.f32 %v1038, %v1041
      %v1045 = vadd.f32 %v1025, %v1043
      %v1046 = vadd.f32 %v1026, %v1044
      %1047 = vset.pattern.permute.xlu0 7
      %1048 = vperm.xlu0 %1047, %v921
      %v1049 = vpop.permute.xlu0 %1048
      %v1051 = vmul.f32 %v1001, %v1049
      %v1052 = vmul.f32 %v1002, %v1049
      %v1053 = vmul.f32 %v1003, %v1049
      %1057 = vrot.lane.b32.xlu0 %v1051, 112
      %v1058 = vpop.permute.xlu0 %1057
      %1059 = vrot.lane.b32.xlu0 %v1052, 112
      %v1060 = vpop.permute.xlu0 %1059
      %1061 = vrot.lane.b32.xlu0 %v1053, 112
      %v1062 = vpop.permute.xlu0 %1061
      %v1063 = vsel %vm764, %v1058, %v1060
      %v1064 = vsel %vm764, %v1060, %v1062
      %v1067 = vadd.f32 %v1045, %v1063
      %v1068 = vadd.f32 %v1046, %v1064
      %1069 = vrot.lane.b32.xlu0 %v1001, 111
      %v1070 = vpop.permute.xlu0 %1069
      %1071 = vrot.lane.b32.xlu0 %v1002, 111
      %v1072 = vpop.permute.xlu0 %1071
      %1073 = vrot.lane.b32.xlu0 %v1003, 111
      %v1074 = vpop.permute.xlu0 %1073
      %v1075 = vsel %vm777, %v1070, %v1072
      %v1076 = vsel %vm777, %v1072, %v1074
      %v1079 = vsel %vm648, %v1075, 0.0
      %v1080 = vsel %vm649, %v1076, 0.0
      %1081 = vset.pattern.permute.xlu0 8
      %1082 = vperm.xlu0 %1081, %v921
      %v1083 = vpop.permute.xlu0 %1082
      %v1085 = vmul.f32 %v1079, %v1083
      %v1086 = vmul.f32 %v1080, %v1083
      %v1087 = vadd.f32 %v1067, %v1085
      %v1088 = vadd.f32 %v1068, %v1086
      %v1089 = vld [vmem:[%s7] sm:$0xff]
      %1091 = vset.pattern.permute.xlu0 0
      %1092 = vperm.xlu0 %1091, %v1089
      %v1093 = vpop.permute.xlu0 %1092
      %v1095 = vadd.f32 %v1087, %v1093
      %v1096 = vadd.f32 %v1088, %v1093
      %v1097 = vld [vmem:[%s8] sm:$0xff]
      %vm1098 = vcmask 64512
      %v1100 = vsel %vm1098, %v1097, 0
      %1102 = vmatprep.subr.mxu0 %v1096
      %1103 = vmatpush1.msra.mxu0 %v1095
      %1104 = vmatprep.subr.mxu0 0.0
      %1105 = vmatpush1.msra.mxu0 0.0
      %1106 = vmatprep.subr.mxu0 0.0
      %1107 = vmatpush1.msra.mxu0 0.0
      %1108 = vmatprep.subr.mxu0 0.0
      %1109 = vmatpush1.msra.mxu0 0.0
      %1110 = vmatprep.subr.mxu0 0.0
      %1111 = vmatpush1.msra.mxu0 0.0
      %1112 = vmatprep.subr.mxu0 0.0
      %1113 = vmatpush1.msra.mxu0 0.0
      %1114 = vmatprep.subr.mxu0 0.0
      %1115 = vmatpush1.msra.mxu0 0.0
      %1116 = vmatprep.subr.mxu0 0.0
      %1117 = vmatpush1.msra.mxu0 0.0
      %1118 = vmatprep.subr.mxu0 0.0
      %1119 = vmatpush1.msra.mxu0 0.0
      %1120 = vmatprep.subr.mxu0 0.0
      %1121 = vmatpush1.msra.mxu0 0.0
      %1122 = vmatprep.subr.mxu0 0.0
      %1123 = vmatpush1.msra.mxu0 0.0
      %1124 = vmatprep.subr.mxu0 0.0
      %1125 = vmatpush1.msra.mxu0 0.0
      %1126 = vmatprep.subr.mxu0 0.0
      %1127 = vmatpush1.msra.mxu0 0.0
      %1128 = vmatprep.subr.mxu0 0.0
      %1129 = vmatpush1.msra.mxu0 0.0
      %1130 = vmatprep.subr.mxu0 0.0
      %1131 = vmatpush1.msra.mxu0 0.0
      %1132 = vmatprep.subr.mxu0 0.0
      %1133 = vmatpush1.msra.mxu0 0.0
      %1134 = vmatprep.subr.mxu0 0.0
      %1135 = vmatpush1.msra.mxu0 0.0
      %1136 = vmatprep.subr.mxu0 0.0
      %1137 = vmatpush1.msra.mxu0 0.0
      %1138 = vmatprep.subr.mxu0 0.0
      %1139 = vmatpush1.msra.mxu0 0.0
      %1140 = vmatprep.subr.mxu0 0.0
      %1141 = vmatpush1.msra.mxu0 0.0
      %1142 = vmatprep.subr.mxu0 0.0
      %1143 = vmatpush1.msra.mxu0 0.0
      %1144 = vmatprep.subr.mxu0 0.0
      %1145 = vmatpush1.msra.mxu0 0.0
      %1146 = vmatprep.subr.mxu0 0.0
      %1147 = vmatpush1.msra.mxu0 0.0
      %1148 = vmatprep.subr.mxu0 0.0
      %1149 = vmatpush1.msra.mxu0 0.0
      %1150 = vmatprep.subr.mxu0 0.0
      %1151 = vmatpush1.msra.mxu0 0.0
      %1152 = vmatprep.subr.mxu0 0.0
      %1153 = vmatpush1.msra.mxu0 0.0
      %1154 = vmatprep.subr.mxu0 0.0
      %1155 = vmatpush1.msra.mxu0 0.0
      %1156 = vmatprep.subr.mxu0 0.0
      %1157 = vmatpush1.msra.mxu0 0.0
      %1158 = vmatprep.subr.mxu0 0.0
      %1159 = vmatpush1.msra.mxu0 0.0
      %1160 = vmatprep.subr.mxu0 0.0
      %1161 = vmatpush1.msra.mxu0 0.0
      %1162 = vmatprep.subr.mxu0 0.0
      %1163 = vmatpush1.msra.mxu0 0.0
      %1164 = vmatprep.subr.mxu0 0.0
      %1165 = vmatpush1.msra.mxu0 0.0
      %1166 = vmatprep.mubr.f32.mxu0 0.0
      %1167 = vmatmul.mubr.f32.gmra.mrb[0].mxu0 %v1100
      %v1168 = vpop.f32.mrb[0].mxu0
      %v1169 = vadd.f32 0.0, %v1168
      %v1170 = vpop.f32.mrb[0].mxu0
      %v1171 = vadd.f32 0.0, %v1170
      %1172 = vdwg.mxu0
      %v1173 = vld [vmem:[%s9] sm:$0xff]
      %1175 = vset.pattern.permute.xlu0 0
      %1176 = vperm.xlu0 %1175, %v1173
      %v1177 = vpop.permute.xlu0 %1176
      %v1179 = vmul.f32 %v1169, %v1177
      %v1180 = vmul.f32 %v1171, %v1177
      %v1181 = vld [vmem:[%s10] sm:$0xff]
      %1183 = vset.pattern.permute.xlu0 0
      %1184 = vperm.xlu0 %1183, %v1181
      %v1185 = vpop.permute.xlu0 %1184
      %v1187 = vadd.f32 %v1179, %v1185
      %v1188 = vadd.f32 %v1180, %v1185
      %v1189 = vmax.f32 %v1187, 0.0
      %v1190 = vmax.f32 %v1188, 0.0
      %v1191 = vadd.f32 %v1189, %v1190
      %1192 = vadd.xlane.f32.xlu0 %v1191
      %v1193 = vpop.xlane.xlu0 %1192
      %v1194 = vrcp.pop 256.0
      %v1195 = vmul.f32 %v1193, %v1194
      %v1196 = vld [vmem:[%s11] sm:$0xff]
      %v1197 = vmul.f32 %v1196, %v1195
      %v1198 = vsel %vm677, %v1197, 0.0
      %v1199 = vrot.slane %v1198, 4
      %v1200 = vadd.f32 %v1198, %v1199
      %v1201 = vrot.slane %v1200, 2
      %v1202 = vadd.f32 %v1200, %v1201
      %v1203 = vrot.slane %v1202, 1
      %v1204 = vadd.f32 %v1202, %v1203
      %v1205 = vld [vmem:[#allocation3] sm:$0x1]
      %v1206 = vadd.f32 %v1204, %v1205
      %v1207 = vmax.f32 %v1206, 0.0
      %v1208 = vld [vmem:[%s13] sm:$0xff]
      %v1209 = vlaneseq
      %v1210 = vshrl.u32 %v1209, 7
      %v1211 = vsub.s32 0, %v1210
      %v1212 = vrot.slane %v1207, %v1211
      %v1213 = vmul.f32 %v1208, %v1212
      %v1214 = vadd.f32 %v1213, 0.0
      %v1215 = vld [vmem:[%s14] sm:$0xff]
      %v1216 = vadd.f32 %v1214, %v1215
      %v1217 = vxor.u32 %v1216, 2147483648
      %v1218 = vmul.f32 %v1217, 1.442695
      %v1219 = vpow.pop %v1218
      %v1220 = vadd.f32 %v1219, 1.0
      %v1221 = vrcp.pop %v1220
      %v1222 = vmul.f32 1.0, %v1221
      %v1223 = vld [vmem:[%s15] sm:$0xff]
      %v1224 = vld [vmem:[%s16] sm:$0xff]
      %1226 = vset.pattern.permute.xlu0 0
      %1227 = vperm.xlu0 %1226, %v1224
      %v1228 = vpop.permute.xlu0 %1227
      %v1231 = vsel %vm801, %v1223, 0
      %v1233 = vsel %vm805, %v584, 0
      %v1235 = vsel %vm805, %v586, 0
      %1237 = vmatprep.subr.mxu0 %v1235
      %1238 = vmatpush1.msra.mxu0 %v1233
      %1239 = vmatprep.subr.mxu0 0.0
      %1240 = vmatpush1.msra.mxu0 0.0
      %1241 = vmatprep.subr.mxu0 0.0
      %1242 = vmatpush1.msra.mxu0 0.0
      %1243 = vmatprep.subr.mxu0 0.0
      %1244 = vmatpush1.msra.mxu0 0.0
      %1245 = vmatprep.subr.mxu0 0.0
      %1246 = vmatpush1.msra.mxu0 0.0
      %1247 = vmatprep.subr.mxu0 0.0
      %1248 = vmatpush1.msra.mxu0 0.0
      %1249 = vmatprep.subr.mxu0 0.0
      %1250 = vmatpush1.msra.mxu0 0.0
      %1251 = vmatprep.subr.mxu0 0.0
      %1252 = vmatpush1.msra.mxu0 0.0
      %1253 = vmatprep.subr.mxu0 0.0
      %1254 = vmatpush1.msra.mxu0 0.0
      %1255 = vmatprep.subr.mxu0 0.0
      %1256 = vmatpush1.msra.mxu0 0.0
      %1257 = vmatprep.subr.mxu0 0.0
      %1258 = vmatpush1.msra.mxu0 0.0
      %1259 = vmatprep.subr.mxu0 0.0
      %1260 = vmatpush1.msra.mxu0 0.0
      %1261 = vmatprep.subr.mxu0 0.0
      %1262 = vmatpush1.msra.mxu0 0.0
      %1263 = vmatprep.subr.mxu0 0.0
      %1264 = vmatpush1.msra.mxu0 0.0
      %1265 = vmatprep.subr.mxu0 0.0
      %1266 = vmatpush1.msra.mxu0 0.0
      %1267 = vmatprep.subr.mxu0 0.0
      %1268 = vmatpush1.msra.mxu0 0.0
      %1269 = vmatprep.subr.mxu0 0.0
      %1270 = vmatpush1.msra.mxu0 0.0
      %1271 = vmatprep.subr.mxu0 0.0
      %1272 = vmatpush1.msra.mxu0 0.0
      %1273 = vmatprep.subr.mxu0 0.0
      %1274 = vmatpush1.msra.mxu0 0.0
      %1275 = vmatprep.subr.mxu0 0.0
      %1276 = vmatpush1.msra.mxu0 0.0
      %1277 = vmatprep.subr.mxu0 0.0
      %1278 = vmatpush1.msra.mxu0 0.0
      %1279 = vmatprep.subr.mxu0 0.0
      %1280 = vmatpush1.msra.mxu0 0.0
      %1281 = vmatprep.subr.mxu0 0.0
      %1282 = vmatpush1.msra.mxu0 0.0
      %1283 = vmatprep.subr.mxu0 0.0
      %1284 = vmatpush1.msra.mxu0 0.0
      %1285 = vmatprep.subr.mxu0 0.0
      %1286 = vmatpush1.msra.mxu0 0.0
      %1287 = vmatprep.subr.mxu0 0.0
      %1288 = vmatpush1.msra.mxu0 0.0
      %1289 = vmatprep.subr.mxu0 0.0
      %1290 = vmatpush1.msra.mxu0 0.0
      %1291 = vmatprep.subr.mxu0 0.0
      %1292 = vmatpush1.msra.mxu0 0.0
      %1293 = vmatprep.subr.mxu0 0.0
      %1294 = vmatpush1.msra.mxu0 0.0
      %1295 = vmatprep.subr.mxu0 0.0
      %1296 = vmatpush1.msra.mxu0 0.0
      %1297 = vmatprep.subr.mxu0 0.0
      %1298 = vmatpush1.msra.mxu0 0.0
      %1299 = vmatprep.subr.mxu0 0.0
      %1300 = vmatpush1.msra.mxu0 0.0
      %1301 = vmatprep.mubr.f32.mxu0 0.0
      %1302 = vmatmul.mubr.f32.gmra.mrb[0].mxu0 %v1231
      %v1303 = vpop.f32.mrb[0].mxu0
      %v1304 = vadd.f32 %v1228, %v1303
      %v1305 = vpop.f32.mrb[0].mxu0
      %v1306 = vadd.f32 %v1228, %v1305
      %1307 = vdwg.mxu0
      %1309 = vset.pattern.permute.xlu0 0
      %1310 = vperm.xlu0 %1309, %v1222
      %v1311 = vpop.permute.xlu0 %1310
      %v1313 = vmul.f32 %v1189, %v1311
      %v1314 = vmul.f32 %v1190, %v1311
      %v1315 = vadd.f32 %v1313, %v1304
      %v1316 = vadd.f32 %v1314, %v1306
      %1317 = vst [vmem:[%s550] sm:$0xff] %v1315
      %1318 = vst [vmem:[%s550 + $0x8] sm:$0xff] %v1316
      %p1319 = scmp.lt.s32.totalorder %s30, 1
      %s1320 = scalar_select %p1319, %s30, 1
      %s1321 = smul.addr %s1320, 2
      %s1322 = smul.addr %s1321, 8
      %s1323 = scalar_lea.vmem %s17, %s1322
      // Predicated region
      $region89: #{conv_block_forward.1} parent=87 // pred_check
        %p1324 = pneg %p410
      $region90: #{conv_block_forward.1} parent=87 // pred_check_branch
        %1326 = sbr.rel (%p1324) target = $region92
      $region91: #{conv_block_forward.1} parent=87 // pred_region
        _
      $region92: #{conv_block_forward.1} parent=87 // pred_fallthru
        _
    $region88: #{conv_block_forward.1} parent=5 // pred_fallthru
      _
    %p1327 = scmp.le.s32.totalorder 2, %s25
    // Predicated region
    $region93: #{conv_block_forward.1} parent=5 // pred_check
      %p1328 = pneg %p1327
    $region94: #{conv_block_forward.1} parent=5 // pred_check_branch
      %1330 = sbr.rel (%p1328) target = $region96
    $region95: #{conv_block_forward.1} parent=5 // pred_region
      %s1331 = ssub.s32 %s25, 2
      // Predicated region
      $region97: #{conv_block_forward.1} parent=95 // pred_check
        %p1332 = pneg %p416
      $region98: #{conv_block_forward.1} parent=95 // pred_check_branch
        %1334 = sbr.rel (%p1332) target = $region100
      $region99: #{conv_block_forward.1} parent=95 // pred_region
        %p1335 = scmp.lt.s32.totalorder %s31, 1
        %s1336 = scalar_select %p1335, %s31, 1
        %s1337 = smul.addr %s1336, 2
        %s1338 = smul.addr %s1337, 8
        %s1339 = scalar_lea.vmem %s17, %s1338
      $region100: #{conv_block_forward.1} parent=95 // pred_fallthru
        _
    $region96: #{conv_block_forward.1} parent=5 // pred_fallthru
      _
  $region6: #{conv_block_forward.1} parent=0 // loop_footer
    %s29 = sadd.s32 1, %s25
  $region7: #{conv_block_forward.1} parent=0 // loop_footer_branch
    %24 = sbr.rel target = $region3
  $region8: #{conv_block_forward.1} parent=0 // loop_exit
    _

</llo_original>
